<compile_context>
chip_gen: v6e
topology: v6e:2x2x1
jax: 0.10.0
libtpu: 0.0.40
codegen_flags: <defaults>
</compile_context>

<pallas_src>
import functools

import jax
import jax.numpy as jnp
from jax import lax
from jax.experimental import pallas as pl
from jax.experimental.pallas import tpu as pltpu


def _round_up(x, m):
    return ((x + m - 1) // m) * m


def _cdiv(a, b):
    return -(-a // b)


def repconv_kernel(body_ref, h0_ref, h1_ref, w_ref, b_ref, o_ref, *, pack):
    """One (batch, row-tile) grid step.

    body_ref : (1, TH, Wp, C1)   row-tile of the zero-padded image (bf16)
    h0_ref   : (1, 1, Wp, C1)    halo row  r*TH + TH      of the padded image
    h1_ref   : (1, 1, Wp, C1)    halo row  r*TH + TH + 1  of the padded image
    w_ref    : (3, 3, C1, C2)    fused weights (bf16)      [pack=False]
               (3, 3*C1, C2)     dx-packed fused weights   [pack=True]
    b_ref    : (1, C2)           fused bias (f32)
    o_ref    : (1, TH, W, C2)    output row tile
    """
    TH, W, C2 = o_ref.shape[1], o_ref.shape[2], o_ref.shape[3]
    Wp = body_ref.shape[2]
    C1 = body_ref.shape[3]
    L = TH * Wp

    # Assemble the (TH+3)-row slab: body rows + 2 halo rows + one zeros row
    # (the zeros row is only ever read into junk output columns that get
    # cropped at the store).  Wp % 8 == 0 makes the reshape layout-preserving.
    zrow = jnp.zeros((1, Wp, C1), body_ref.dtype)
    x3 = jnp.concatenate([body_ref[0], h0_ref[0], h1_ref[0], zrow], axis=0)
    x2 = x3.reshape((TH + 3) * Wp, C1)

    # 3x3 "same" conv over the padded width; each tap is a contiguous
    # row-offset slice of the flat slab feeding the MXU with f32 accumulation.
    # Junk columns [W, Wp) are dropped once at the store.
    acc = jnp.zeros((L, C2), jnp.float32)
    if pack:
        # Pack the 3 dx taps into the contraction dim: K = 3*C1 (better MXU
        # depth utilisation when C1 is small, 3 accumulate passes instead of 9).
        for dy in range(3):
            base = dy * Wp
            xcat = jnp.concatenate(
                [x2[base:base + L],
                 x2[base + 1:base + 1 + L],
                 x2[base + 2:base + 2 + L]], axis=1)          # (L, 3*C1)
            acc = acc + jnp.dot(xcat, w_ref[dy],
                                preferred_element_type=jnp.float32)
    else:
        for dy in range(3):
            for dx in range(3):
                off = dy * Wp + dx
                acc = acc + jnp.dot(x2[off:off + L], w_ref[dy, dx],
                                    preferred_element_type=jnp.float32)

    acc = acc + b_ref[0]                     # fused bias (3x3 + 1x1 branches)
    acc = acc * jax.nn.sigmoid(acc)          # SiLU in f32 (EUP)

    o_ref[0] = acc.reshape(TH, Wp, C2)[:, :W, :].astype(o_ref.dtype)


def _fold_bn(w_hwio, gamma, beta, mean, var, eps=1e-5):
    """Fold eval-mode BatchNorm into conv weight (HWIO) + bias."""
    std = jnp.sqrt(var + eps)
    scale = gamma / std                      # (C2,)
    return w_hwio * scale[None, None, None, :], beta - mean * scale


def fuse_repconv_params(params, eps=1e-5):
    """RepConv re-parameterisation: fold BN of each branch, fuse the 1x1
    branch (and optional identity-BN branch) into the 3x3 kernel + bias."""
    w3, g3, b3, m3, v3 = params["conv1"]
    w1, g1, b1, m1, v1 = params["conv2"]
    w3_f, bias3 = _fold_bn(w3, g3, b3, m3, v3, eps)      # (3,3,C1,C2), (C2,)
    w1_f, bias1 = _fold_bn(w1, g1, b1, m1, v1, eps)      # (1,1,C1,C2), (C2,)
    w = w3_f.at[1, 1].add(w1_f[0, 0])
    b = bias3 + bias1
    idbn = params.get("bn")
    if idbn is not None:                                  # bn=True branch
        c1, c2 = w3.shape[2], w3.shape[3]
        assert c1 == c2, "identity BN branch requires c1 == c2"
        gI, bI, mI, vI = idbn
        scale = gI / jnp.sqrt(vI + eps)
        w = w.at[1, 1].add(jnp.diag(scale))               # scaled identity tap
        b = b + (bI - mI * scale)
    # TODO(synk): grouped convolution (g > 1) is not supported by this kernel.
    return w, b


def _vmem_limit_bytes():
    """Scoped-VMEM limit derived from the chip's physical VMEM capacity."""
    cap = 64 << 20
    try:
        info = pltpu.get_tpu_info()
        cap = int(getattr(info, "vmem_capacity_bytes", cap) or cap)
    except Exception:
        pass
    return min(int(cap * 0.75), 100 << 20)


def _choose_tile_h(H, W, Wp, C1, C2, pack_k, vmem_limit):
    """Largest row-tile whose real (double-buffered) VMEM footprint fits."""
    budget = int(vmem_limit * 0.6)
    w_bytes = 2 * 9 * C1 * C2 * 2                 # weights ARE double-buffered
    halo = 2 * 2 * 2 * Wp * C1 * 2                # 2 halo specs, 2 buffers each
    fixed = w_bytes + halo + (1 << 20)            # + slack for bias/internal
    best = 1
    for th in range(1, min(H, 2048) + 1):
        in_tile = 2 * th * Wp * C1 * 2            # body tile, double-buffered
        out_tile = 2 * th * W * C2 * 4            # output tile, double-buffered
        slab = (th + 3) * Wp * C1 * 2             # in-kernel concat slab
        acc = th * Wp * C2 * 4                    # f32 accumulator
        pack_tmp = 3 * th * Wp * C1 * 2 if pack_k else 0
        if fixed + in_tile + out_tile + slab + acc + pack_tmp <= budget:
            best = th
    return best


def repconv_forward(x_nchw, params, tile_h=None, compute_dtype=jnp.bfloat16,
                    out_dtype=jnp.float32, pack_k=None):
    """x_nchw: (N, C1, H, W) float32.  Returns (N, C2, H, W) in out_dtype."""
    w_f, bias = fuse_repconv_params(params)
    N, C1, H, W = x_nchw.shape
    C2 = w_f.shape[-1]
    Wp = _round_up(W + 2, 8)                      # lane/sublane-friendly width

    if pack_k is None:
        pack_k = C1 < 128                         # K-pack small-channel layers

    vmem_limit = _vmem_limit_bytes()
    tile_h_auto = tile_h is None
    if tile_h_auto:
        tile_h = _choose_tile_h(H, W, Wp, C1, C2, pack_k, vmem_limit)
    tile_h = max(1, min(int(tile_h), H))
    nt = _cdiv(H, tile_h)
    if tile_h_auto:
        tile_h = _cdiv(H, nt)                     # balance ragged last tile
        if N * nt < 2 and H >= 2:                 # keep both v7x cores busy
            nt = 2
            tile_h = _cdiv(H, nt)
    H_pad = nt * tile_h

    # TODO(synk): NCHW<->NHWC transposes kept only to match the PyTorch
    # interface; run the surrounding model in NHWC (and bf16) to remove them.
    # Cast to bf16 BEFORE padding so the fused transpose+cast+pad pass moves
    # half the bytes.
    x_nhwc = jnp.transpose(x_nchw, (0, 2, 3, 1)).astype(compute_dtype)
    xp = jnp.pad(x_nhwc, ((0, 0), (1, H_pad - H + 1), (1, Wp - W - 1), (0, 0)))
    # xp: (N, H_pad + 2, Wp, C1), zero-padded.

    if pack_k:
        w_c = w_f.reshape(3, 3 * C1, C2).astype(compute_dtype)
        w_spec = pl.BlockSpec((3, 3 * C1, C2), lambda n, r: (0, 0, 0))
    else:
        w_c = w_f.astype(compute_dtype)
        w_spec = pl.BlockSpec((3, 3, C1, C2), lambda n, r: (0, 0, 0, 0))
    b_c = bias.reshape(1, C2).astype(jnp.float32)

    # Overlapping windows without a stacked copy: body block + two single-row
    # halo blocks (block size 1 along H => blocked index == row index).
    body_spec = pl.BlockSpec((1, tile_h, Wp, C1), lambda n, r: (n, r, 0, 0))
    h0_spec = pl.BlockSpec((1, 1, Wp, C1),
                           lambda n, r: (n, (r + 1) * tile_h, 0, 0))
    h1_spec = pl.BlockSpec((1, 1, Wp, C1),
                           lambda n, r: (n, (r + 1) * tile_h + 1, 0, 0))
    out_spec = pl.BlockSpec((1, tile_h, W, C2), lambda n, r: (n, r, 0, 0))
    # TODO(synk): for very large C1*C2 on v7x (64 MiB VMEM), add an output-
    # channel grid axis so the resident weight block stays small.

    cost = pl.CostEstimate(
        flops=2 * N * H_pad * Wp * 9 * C1 * C2,
        transcendentals=N * H_pad * Wp * C2,
        bytes_accessed=int(xp.size) * 2 + N * H_pad * W * C2
        * jnp.dtype(out_dtype).itemsize + int(w_c.size) * 2 + C2 * 4,
    )

    out_nhwc = pl.pallas_call(
        functools.partial(repconv_kernel, pack=pack_k),
        out_shape=jax.ShapeDtypeStruct((N, H_pad, W, C2), out_dtype),
        grid_spec=pltpu.PrefetchScalarGridSpec(
            num_scalar_prefetch=0,
            grid=(N, nt),
            in_specs=[body_spec, h0_spec, h1_spec, w_spec,
                      pl.BlockSpec((1, C2), lambda n, r: (0, 0))],
            out_specs=out_spec,
        ),
        compiler_params=pltpu.CompilerParams(
            dimension_semantics=("parallel", "parallel"),
            vmem_limit_bytes=vmem_limit,
        ),
        cost_estimate=cost,
    )(xp, xp, xp, w_c, b_c)

    return jnp.transpose(out_nhwc[:, :H], (0, 3, 1, 2))


def reference_forward(x_nchw, params, compute_dtype=jnp.bfloat16):
    """Fused-weight XLA reference using the same low-precision operands."""
    w_f, bias = fuse_repconv_params(params)
    x = jnp.transpose(x_nchw, (0, 2, 3, 1))
    y = lax.conv_general_dilated(
        x.astype(compute_dtype), w_f.astype(compute_dtype), (1, 1), "SAME",
        dimension_numbers=("NHWC", "HWIO", "NHWC"),
        preferred_element_type=jnp.float32)
    y = y + bias.astype(jnp.float32)
    y = y * jax.nn.sigmoid(y)
    return jnp.transpose(y, (0, 3, 1, 2))


def reference_forward_unfused(x_nchw, params):
    """Two-branch f32 reference mirroring RepConv.forward literally."""
    w3, g3, b3, m3, v3 = params["conv1"]
    w1, g1, b1, m1, v1 = params["conv2"]
    w3_f, bias3 = _fold_bn(w3, g3, b3, m3, v3)
    w1_f, bias1 = _fold_bn(w1, g1, b1, m1, v1)
    x = jnp.transpose(x_nchw, (0, 2, 3, 1))
    dn = ("NHWC", "HWIO", "NHWC")
    y3 = lax.conv_general_dilated(x, w3_f, (1, 1), "SAME", dimension_numbers=dn)
    y1 = lax.conv_general_dilated(x, w1_f, (1, 1), "VALID", dimension_numbers=dn)
    y = y3 + bias3 + y1 + bias1
    y = y * jax.nn.sigmoid(y)
    return jnp.transpose(y, (0, 3, 1, 2))


def make_params(key, c1, c2):
    """Deterministic synthetic parameters matching RepConv(c1, c2) shapes."""
    ks = jax.random.split(key, 8)
    w3 = 0.1 * jax.random.normal(ks[0], (3, 3, c1, c2), jnp.float32)    # HWIO
    g3 = 1.0 + 0.1 * jax.random.normal(ks[1], (c2,), jnp.float32)
    b3 = 0.1 * jax.random.normal(ks[2], (c2,), jnp.float32)
    m3 = 0.05 * jax.random.normal(ks[3], (c2,), jnp.float32)
    v3 = jnp.abs(jax.random.normal(ks[4], (c2,), jnp.float32)) + 0.5
    w1 = 0.1 * jax.random.normal(ks[5], (1, 1, c1, c2), jnp.float32)
    g1 = 1.0 + 0.1 * jax.random.normal(ks[6], (c2,), jnp.float32)
    b1 = 0.1 * jax.random.normal(ks[7], (c2,), jnp.float32)
    m1 = jnp.zeros((c2,), jnp.float32)
    v1 = jnp.ones((c2,), jnp.float32)
    return {"conv1": (w3, g3, b3, m3, v3), "conv2": (w1, g1, b1, m1, v1)}


if __name__ == "__main__":
    key = jax.random.PRNGKey(0)
    kx, kp = jax.random.split(key)

    N, C1, C2, H, W = 2, 4, 8, 16, 16
    x = jax.random.normal(kx, (N, C1, H, W), jnp.float32)
    params = make_params(kp, C1, C2)

    ref = reference_forward(x, params)            # fused bf16-operand XLA conv
    full = reference_forward_unfused(x, params)   # literal two-branch f32

    # Config 1: multi-tile rows (halo path) + K-packed taps (auto for C1<128).
    fwd1 = jax.jit(functools.partial(repconv_forward, tile_h=8))
    out1 = jax.block_until_ready(fwd1(x, params))
    assert out1.shape == (N, C2, H, W)
    err1 = float(jnp.max(jnp.abs(out1 - ref)))
    assert jnp.allclose(out1, ref, atol=2e-3, rtol=2e-3), f"packed err {err1}"
    err1f = float(jnp.max(jnp.abs(out1 - full)))
    assert jnp.allclose(out1, full, atol=3e-2, rtol=3e-2), f"unfused err {err1f}"

    # Config 2: unpacked 9-tap path, auto tile size.
    fwd2 = jax.jit(functools.partial(repconv_forward, pack_k=False))
    out2 = jax.block_until_ready(fwd2(x, params))
    err2 = float(jnp.max(jnp.abs(out2 - ref)))
    assert jnp.allclose(out2, ref, atol=2e-3, rtol=2e-3), f"unpacked err {err2}"

    print("KERNEL_OK")
</pallas_src>

<mosaic_0001>
module attributes {stable_mosaic.version = 11 : i64} {
  func.func @repconv_kernel(%arg0: i32, %arg1: i32, %arg2: memref<1x8x24x4xbf16, #tpu.memory_space<vmem>>, %arg3: memref<1x1x24x4xbf16, #tpu.memory_space<vmem>>, %arg4: memref<1x1x24x4xbf16, #tpu.memory_space<vmem>>, %arg5: memref<3x12x8xbf16, #tpu.memory_space<vmem>>, %arg6: memref<1x8xf32, #tpu.memory_space<vmem>>, %arg7: memref<1x8x16x8xf32, #tpu.memory_space<vmem>>) attributes {dimension_semantics = [#tpu.dimension_semantics<parallel>, #tpu.dimension_semantics<parallel>], iteration_bounds = array<i64: 2, 2>, scalar_prefetch = 0 : i64, scratch_operands = 0 : i64, tpu.core_type = #tpu.core_type<tc>, window_params = [{transform_indices = @transform_0, window_bounds = array<i64: 1, 8, 24, 4>}, {transform_indices = @transform_1, window_bounds = array<i64: 1, 1, 24, 4>}, {transform_indices = @transform_2, window_bounds = array<i64: 1, 1, 24, 4>}, {pipeline_mode = #tpu.pipeline_mode<synchronous>, transform_indices = @transform_3, window_bounds = array<i64: 3, 12, 8>}, {pipeline_mode = #tpu.pipeline_mode<synchronous>, transform_indices = @transform_4, window_bounds = array<i64: 1, 8>}, {transform_indices = @transform_5, window_bounds = array<i64: 1, 8, 16, 8>}]} {
    %cst = arith.constant 0.000000e+00 : bf16
    %0 = vector.broadcast %cst : bf16 to vector<1x24x4xbf16>
    %c0 = arith.constant 0 : index
    %c0_0 = arith.constant 0 : index
    %c0_1 = arith.constant 0 : index
    %c0_2 = arith.constant 0 : index
    %1 = vector.load %arg2[%c0, %c0_0, %c0_1, %c0_2] : memref<1x8x24x4xbf16, #tpu.memory_space<vmem>>, vector<1x8x24x4xbf16>
    %2 = vector.shape_cast %1 : vector<1x8x24x4xbf16> to vector<8x24x4xbf16>
    %c0_3 = arith.constant 0 : index
    %c0_4 = arith.constant 0 : index
    %c0_5 = arith.constant 0 : index
    %c0_6 = arith.constant 0 : index
    %3 = vector.load %arg3[%c0_3, %c0_4, %c0_5, %c0_6] : memref<1x1x24x4xbf16, #tpu.memory_space<vmem>>, vector<1x1x24x4xbf16>
    %4 = vector.shape_cast %3 : vector<1x1x24x4xbf16> to vector<1x24x4xbf16>
    %c0_7 = arith.constant 0 : index
    %c0_8 = arith.constant 0 : index
    %c0_9 = arith.constant 0 : index
    %c0_10 = arith.constant 0 : index
    %5 = vector.load %arg4[%c0_7, %c0_8, %c0_9, %c0_10] : memref<1x1x24x4xbf16, #tpu.memory_space<vmem>>, vector<1x1x24x4xbf16>
    %6 = vector.shape_cast %5 : vector<1x1x24x4xbf16> to vector<1x24x4xbf16>
    %7 = tpu.concatenate %2, %4, %6, %0 in 0 : vector<8x24x4xbf16>, vector<1x24x4xbf16>, vector<1x24x4xbf16>, vector<1x24x4xbf16> -> vector<11x24x4xbf16>
    %8 = vector.shape_cast %7 : vector<11x24x4xbf16> to vector<264x4xbf16>
    %cst_11 = arith.constant 0.000000e+00 : f32
    %9 = vector.broadcast %cst_11 : f32 to vector<192x8xf32>
    %10 = vector.extract_strided_slice %8 {offsets = [0, 0], sizes = [192, 4], strides = [1, 1]} : vector<264x4xbf16> to vector<192x4xbf16>
    %11 = vector.extract_strided_slice %8 {offsets = [1, 0], sizes = [192, 4], strides = [1, 1]} : vector<264x4xbf16> to vector<192x4xbf16>
    %12 = vector.extract_strided_slice %8 {offsets = [2, 0], sizes = [192, 4], strides = [1, 1]} : vector<264x4xbf16> to vector<192x4xbf16>
    %13 = tpu.concatenate %10, %11, %12 in 1 : vector<192x4xbf16>, vector<192x4xbf16>, vector<192x4xbf16> -> vector<192x12xbf16>
    %c0_12 = arith.constant 0 : index
    %c0_13 = arith.constant 0 : index
    %c0_14 = arith.constant 0 : index
    %14 = vector.load %arg5[%c0_12, %c0_13, %c0_14] : memref<3x12x8xbf16, #tpu.memory_space<vmem>>, vector<1x12x8xbf16>
    %15 = vector.shape_cast %14 : vector<1x12x8xbf16> to vector<12x8xbf16>
    %cst_15 = arith.constant dense<0.000000e+00> : vector<192x8xf32>
    %16 = tpu.matmul %13, %15, %cst_15 {dimension_numbers = #tpu.dot_dimension_numbers<[1], [0], [0], [1], [0, 0, 1, 1], [], []>} : vector<192x12xbf16>, vector<12x8xbf16>, vector<192x8xf32> -> vector<192x8xf32>
    %17 = arith.addf %9, %16 : vector<192x8xf32>
    %18 = vector.extract_strided_slice %8 {offsets = [24, 0], sizes = [192, 4], strides = [1, 1]} : vector<264x4xbf16> to vector<192x4xbf16>
    %19 = vector.extract_strided_slice %8 {offsets = [25, 0], sizes = [192, 4], strides = [1, 1]} : vector<264x4xbf16> to vector<192x4xbf16>
    %20 = vector.extract_strided_slice %8 {offsets = [26, 0], sizes = [192, 4], strides = [1, 1]} : vector<264x4xbf16> to vector<192x4xbf16>
    %21 = tpu.concatenate %18, %19, %20 in 1 : vector<192x4xbf16>, vector<192x4xbf16>, vector<192x4xbf16> -> vector<192x12xbf16>
    %c1 = arith.constant 1 : index
    %c0_16 = arith.constant 0 : index
    %c0_17 = arith.constant 0 : index
    %22 = vector.load %arg5[%c1, %c0_16, %c0_17] : memref<3x12x8xbf16, #tpu.memory_space<vmem>>, vector<1x12x8xbf16>
    %23 = vector.shape_cast %22 : vector<1x12x8xbf16> to vector<12x8xbf16>
    %cst_18 = arith.constant dense<0.000000e+00> : vector<192x8xf32>
    %24 = tpu.matmul %21, %23, %cst_18 {dimension_numbers = #tpu.dot_dimension_numbers<[1], [0], [0], [1], [0, 0, 1, 1], [], []>} : vector<192x12xbf16>, vector<12x8xbf16>, vector<192x8xf32> -> vector<192x8xf32>
    %25 = arith.addf %17, %24 : vector<192x8xf32>
    %26 = vector.extract_strided_slice %8 {offsets = [48, 0], sizes = [192, 4], strides = [1, 1]} : vector<264x4xbf16> to vector<192x4xbf16>
    %27 = vector.extract_strided_slice %8 {offsets = [49, 0], sizes = [192, 4], strides = [1, 1]} : vector<264x4xbf16> to vector<192x4xbf16>
    %28 = vector.extract_strided_slice %8 {offsets = [50, 0], sizes = [192, 4], strides = [1, 1]} : vector<264x4xbf16> to vector<192x4xbf16>
    %29 = tpu.concatenate %26, %27, %28 in 1 : vector<192x4xbf16>, vector<192x4xbf16>, vector<192x4xbf16> -> vector<192x12xbf16>
    %c2 = arith.constant 2 : index
    %c0_19 = arith.constant 0 : index
    %c0_20 = arith.constant 0 : index
    %30 = vector.load %arg5[%c2, %c0_19, %c0_20] : memref<3x12x8xbf16, #tpu.memory_space<vmem>>, vector<1x12x8xbf16>
    %31 = vector.shape_cast %30 : vector<1x12x8xbf16> to vector<12x8xbf16>
    %cst_21 = arith.constant dense<0.000000e+00> : vector<192x8xf32>
    %32 = tpu.matmul %29, %31, %cst_21 {dimension_numbers = #tpu.dot_dimension_numbers<[1], [0], [0], [1], [0, 0, 1, 1], [], []>} : vector<192x12xbf16>, vector<12x8xbf16>, vector<192x8xf32> -> vector<192x8xf32>
    %33 = arith.addf %25, %32 : vector<192x8xf32>
    %c0_22 = arith.constant 0 : index
    %c0_23 = arith.constant 0 : index
    %34 = vector.load %arg6[%c0_22, %c0_23] : memref<1x8xf32, #tpu.memory_space<vmem>>, vector<1x8xf32>
    %35 = vector.shape_cast %34 : vector<1x8xf32> to vector<8xf32>
    %36 = vector.shape_cast %35 : vector<8xf32> to vector<1x8xf32>
    %37 = vector.broadcast %36 : vector<1x8xf32> to vector<192x8xf32>
    %38 = arith.addf %33, %37 : vector<192x8xf32>
    %39 = arith.negf %38 : vector<192x8xf32>
    %40 = math.exp %39 : vector<192x8xf32>
    %cst_24 = arith.constant 1.000000e+00 : f32
    %41 = vector.broadcast %cst_24 : f32 to vector<192x8xf32>
    %42 = arith.addf %41, %40 : vector<192x8xf32>
    %43 = arith.divf %41, %42 : vector<192x8xf32>
    %44 = arith.mulf %38, %43 : vector<192x8xf32>
    %45 = vector.shape_cast %44 : vector<192x8xf32> to vector<8x24x8xf32>
    %46 = vector.extract_strided_slice %45 {offsets = [0, 0, 0], sizes = [8, 16, 8], strides = [1, 1, 1]} : vector<8x24x8xf32> to vector<8x16x8xf32>
    %c0_25 = arith.constant 0 : index
    %c0_26 = arith.constant 0 : index
    %c0_27 = arith.constant 0 : index
    %c0_28 = arith.constant 0 : index
    %47 = vector.load %arg7[%c0_25, %c0_26, %c0_27, %c0_28] : memref<1x8x16x8xf32, #tpu.memory_space<vmem>>, vector<1x8x16x8xf32>
    %48 = vector.shape_cast %47 : vector<1x8x16x8xf32> to vector<8x16x8xf32>
    %49 = vector.shape_cast %46 : vector<8x16x8xf32> to vector<1x8x16x8xf32>
    tpu.vector_store %arg7[%c0_25, %c0_26, %c0_27, %c0_28], %49 {strides = array<i32>} : memref<1x8x16x8xf32, #tpu.memory_space<vmem>>, vector<1x8x16x8xf32>,
    return
  }
  func.func @transform_0(%arg0: i32, %arg1: i32) -> (i32, i32, i32, i32) {
    %c0_i32 = arith.constant 0 : i32
    %c0_i32_0 = arith.constant 0 : i32
    %c0_i32_1 = arith.constant 0 : i32
    return %arg0, %arg1, %c0_i32, %c0_i32_0 : i32, i32, i32, i32
  }
  func.func @transform_1(%arg0: i32, %arg1: i32) -> (i32, i32, i32, i32) {
    %c1_i32 = arith.constant 1 : i32
    %0 = arith.addi %arg1, %c1_i32 : i32
    %c8_i32 = arith.constant 8 : i32
    %1 = arith.muli %0, %c8_i32 : i32
    %c0_i32 = arith.constant 0 : i32
    %c0_i32_0 = arith.constant 0 : i32
    %c0_i32_1 = arith.constant 0 : i32
    return %arg0, %1, %c0_i32, %c0_i32_0 : i32, i32, i32, i32
  }
  func.func @transform_2(%arg0: i32, %arg1: i32) -> (i32, i32, i32, i32) {
    %c1_i32 = arith.constant 1 : i32
    %0 = arith.addi %arg1, %c1_i32 : i32
    %c8_i32 = arith.constant 8 : i32
    %1 = arith.muli %0, %c8_i32 : i32
    %c1_i32_0 = arith.constant 1 : i32
    %2 = arith.addi %1, %c1_i32_0 : i32
    %c0_i32 = arith.constant 0 : i32
    %c0_i32_1 = arith.constant 0 : i32
    %c0_i32_2 = arith.constant 0 : i32
    return %arg0, %2, %c0_i32, %c0_i32_1 : i32, i32, i32, i32
  }
  func.func @transform_3(%arg0: i32, %arg1: i32) -> (i32, i32, i32) {
    %c0_i32 = arith.constant 0 : i32
    %c0_i32_0 = arith.constant 0 : i32
    %c0_i32_1 = arith.constant 0 : i32
    %c0_i32_2 = arith.constant 0 : i32
    return %c0_i32, %c0_i32_0, %c0_i32_1 : i32, i32, i32
  }
  func.func @transform_4(%arg0: i32, %arg1: i32) -> (i32, i32) {
    %c0_i32 = arith.constant 0 : i32
    %c0_i32_0 = arith.constant 0 : i32
    %c0_i32_1 = arith.constant 0 : i32
    return %c0_i32, %c0_i32_0 : i32, i32
  }
  func.func @transform_5(%arg0: i32, %arg1: i32) -> (i32, i32, i32, i32) {
    %c0_i32 = arith.constant 0 : i32
    %c0_i32_0 = arith.constant 0 : i32
    %c0_i32_1 = arith.constant 0 : i32
    return %arg0, %arg1, %c0_i32, %c0_i32_0 : i32, i32, i32, i32
  }
}

</mosaic_0001>

<llo_original>
// kernel: repconv_forward.1
$region0: #{repconv_forward.1}
  #allocation0 [shape = 'u32[]', space=smem, size = 0x4, offset = 0x4, fixed_abs, tag = 'smem constant byte address 0x4 - core index']
  #allocation1 [shape = 'u32[144,128]{1,0:T(1,128)}', space=vmem, size = 0x12000, scoped, tag = 'internal scratch']
  %s0 = inlined_call_operand.vmem [shape: bf16[2,18,24,4], index: 0, kind: input, shape index: {}, may-alias: {0,1,2}]
  %s1 = inlined_call_operand.vmem [shape: bf16[2,18,24,4], index: 1, kind: input, shape index: {}, may-alias: {0,1,2}]
  %s2 = inlined_call_operand.vmem [shape: bf16[2,18,24,4], index: 2, kind: input, shape index: {}, may-alias: {0,1,2}]
  %s3 = inlined_call_operand.vmem [shape: bf16[3,12,8], index: 3, kind: input, shape index: {}]
  %s4 = inlined_call_operand.vmem [shape: f32[1,8], index: 4, kind: input, shape index: {}]
  %s5 = inlined_call_operand.vmem [shape: f32[2,16,16,8], index: 5, kind: output, shape index: {}]
  %s6 = sld [smem:[#allocation0]]
  $region53: #{repconv_forward.1} parent=0
    _
  %s8 = ssub.s32 1, %s6
  %s9 = scalar_select 0, %s8, %s6
  loop: start=0, step=1, limit=6
  $region2: #{repconv_forward.1} parent=0 // loop_pre_header
    _
  $region3: #{repconv_forward.1} parent=0 // loop_header
    %s11 = sphi 0, %s15
    %p12 = scmp.ge.s32.totalorder %s11, 6
    %s18 = sphi 0, %s30
    %s19 = sphi 0, %s26
    %s20 = sphi 0, %s18
    %s21 = sphi 0, %s19
    %s22 = sphi 0, %s20
    %s23 = sphi 0, %s21
    %s35 = sphi 0, %s37
    %s38 = sphi 0, %s35
    %s39 = sphi 0, %s38
    %s55 = sphi 0, %s39
    %s67 = sphi 0, %s69
    %s70 = sphi 0, %s67
    %s71 = sphi 0, %s70
    %s87 = sphi 0, %s71
    %s101 = sphi 0, %s103
    %s104 = sphi 0, %s101
    %s105 = sphi 0, %s104
    %s121 = sphi 0, %s105
    %s125 = sphi 0, %s125
    %s127 = sphi 0, %s125
    %s128 = sphi 0, %s127
    %s142 = sphi 0, %s128
    %s146 = sphi 0, %s146
    %s148 = sphi 0, %s146
    %s149 = sphi 0, %s148
    %s163 = sphi 0, %s149
    %s171 = sphi 0, %s173
    %s174 = sphi 0, %s171
    %s175 = sphi 0, %s174
    %s191 = sphi 0, %s175
  $region4: #{repconv_forward.1} parent=0 // loop_header_branch
    %14 = sbr.rel (%p12) target = $region8
  $region5: #{repconv_forward.1} parent=0 // loop_body
    %s16 = ssub.s32 %s11, 1
    %s17 = ssub.s32 %s11, 2
    %s24 = sadd.s32 1, %s19
    %p25 = scmp.ge.s32.totalorder %s24, 2
    %s26 = scalar_select %p25, 0, %s24
    %s27 = sadd.s32 1, %s18
    %s28 = scalar_select %p25, %s27, %s18
    %p29 = scmp.ge.s32.totalorder %s28, 2
    %s30 = scalar_select %p29, 0, %s28
    %s31 = ssub.s32 %s18, %s30
    %s32 = ssub.s32 %s19, %s26
    %s33 = sor.u32 %s31, %s32
    %p34 = scmp.eq.s32.totalorder %s33, 0
    %s36 = sadd.s32 %s35, 1
    %s37 = scalar_select %p34, %s35, %s36
    %p40 = pneg %p34
    %p41 = scmp.eq.s32.totalorder %s11, 3
    %p42 = por %p40, %p41
    %p43 = scmp.ne.s32.totalorder %s35, %s38
    %p44 = scmp.eq.s32.totalorder %s11, 0
    %p45 = por %p43, %p44
    %p46 = scmp.ne.s32.totalorder %s35, %s38
    %p47 = scmp.eq.s32.totalorder %s16, 3
    %p48 = por %p46, %p47
    %p49 = scmp.ne.s32.totalorder %s38, %s39
    %p50 = scmp.eq.s32.totalorder %s16, 0
    %p51 = por %p49, %p50
    %p52 = scmp.ne.s32.totalorder %s38, %s39
    %p53 = scmp.eq.s32.totalorder %s17, 3
    %p54 = por %p52, %p53
    %p56 = scmp.ne.s32.totalorder %s39, %s55
    %p57 = scmp.eq.s32.totalorder %s17, 0
    %p58 = por %p56, %p57
    %s59 = sadd.s32 %s19, 1
    %s60 = smul.u32 %s59, 8
    %s61 = sadd.s32 %s26, 1
    %s62 = smul.u32 %s61, 8
    %s63 = ssub.s32 %s18, %s30
    %s64 = ssub.s32 %s60, %s62
    %s65 = sor.u32 %s63, %s64
    %p66 = scmp.eq.s32.totalorder %s65, 0
    %s68 = sadd.s32 %s67, 1
    %s69 = scalar_select %p66, %s67, %s68
    %p72 = pneg %p66
    %p73 = scmp.eq.s32.totalorder %s11, 3
    %p74 = por %p72, %p73
    %p75 = scmp.ne.s32.totalorder %s67, %s70
    %p76 = scmp.eq.s32.totalorder %s11, 0
    %p77 = por %p75, %p76
    %p78 = scmp.ne.s32.totalorder %s67, %s70
    %p79 = scmp.eq.s32.totalorder %s16, 3
    %p80 = por %p78, %p79
    %p81 = scmp.ne.s32.totalorder %s70, %s71
    %p82 = scmp.eq.s32.totalorder %s16, 0
    %p83 = por %p81, %p82
    %p84 = scmp.ne.s32.totalorder %s70, %s71
    %p85 = scmp.eq.s32.totalorder %s17, 3
    %p86 = por %p84, %p85
    %p88 = scmp.ne.s32.totalorder %s71, %s87
    %p89 = scmp.eq.s32.totalorder %s17, 0
    %p90 = por %p88, %p89
    %s91 = sadd.s32 %s19, 1
    %s92 = smul.u32 %s91, 8
    %s93 = sadd.s32 %s92, 1
    %s94 = sadd.s32 %s26, 1
    %s95 = smul.u32 %s94, 8
    %s96 = sadd.s32 %s95, 1
    %s97 = ssub.s32 %s18, %s30
    %s98 = ssub.s32 %s93, %s96
    %s99 = sor.u32 %s97, %s98
    %p100 = scmp.eq.s32.totalorder %s99, 0
    %s102 = sadd.s32 %s101, 1
    %s103 = scalar_select %p100, %s101, %s102
    %p106 = pneg %p100
    %p107 = scmp.eq.s32.totalorder %s11, 3
    %p108 = por %p106, %p107
    %p109 = scmp.ne.s32.totalorder %s101, %s104
    %p110 = scmp.eq.s32.totalorder %s11, 0
    %p111 = por %p109, %p110
    %p112 = scmp.ne.s32.totalorder %s101, %s104
    %p113 = scmp.eq.s32.totalorder %s16, 3
    %p114 = por %p112, %p113
    %p115 = scmp.ne.s32.totalorder %s104, %s105
    %p116 = scmp.eq.s32.totalorder %s16, 0
    %p117 = por %p115, %p116
    %p118 = scmp.ne.s32.totalorder %s104, %s105
    %p119 = scmp.eq.s32.totalorder %s17, 3
    %p120 = por %p118, %p119
    %p122 = scmp.ne.s32.totalorder %s105, %s121
    %p123 = scmp.eq.s32.totalorder %s17, 0
    %p124 = por %p122, %p123
    %s126 = sadd.s32 %s125, 1
    %p129 = scmp.eq.s32.totalorder %s11, 3
    %p130 = scmp.ne.s32.totalorder %s125, %s127
    %p131 = scmp.eq.s32.totalorder %s11, 0
    %p132 = por %p130, %p131
    %p133 = scmp.ne.s32.totalorder %s125, %s127
    %p134 = scmp.eq.s32.totalorder %s16, 3
    %p135 = por %p133, %p134
    %p136 = scmp.ne.s32.totalorder %s127, %s128
    %p137 = scmp.eq.s32.totalorder %s16, 0
    %p138 = por %p136, %p137
    %p139 = scmp.ne.s32.totalorder %s127, %s128
    %p140 = scmp.eq.s32.totalorder %s17, 3
    %p141 = por %p139, %p140
    %p143 = scmp.ne.s32.totalorder %s128, %s142
    %p144 = scmp.eq.s32.totalorder %s17, 0
    %p145 = por %p143, %p144
    %s147 = sadd.s32 %s146, 1
    %p150 = scmp.eq.s32.totalorder %s11, 3
    %p151 = scmp.ne.s32.totalorder %s146, %s148
    %p152 = scmp.eq.s32.totalorder %s11, 0
    %p153 = por %p151, %p152
    %p154 = scmp.ne.s32.totalorder %s146, %s148
    %p155 = scmp.eq.s32.totalorder %s16, 3
    %p156 = por %p154, %p155
    %p157 = scmp.ne.s32.totalorder %s148, %s149
    %p158 = scmp.eq.s32.totalorder %s16, 0
    %p159 = por %p157, %p158
    %p160 = scmp.ne.s32.totalorder %s148, %s149
    %p161 = scmp.eq.s32.totalorder %s17, 3
    %p162 = por %p160, %p161
    %p164 = scmp.ne.s32.totalorder %s149, %s163
    %p165 = scmp.eq.s32.totalorder %s17, 0
    %p166 = por %p164, %p165
    %s167 = ssub.s32 %s18, %s30
    %s168 = ssub.s32 %s19, %s26
    %s169 = sor.u32 %s167, %s168
    %p170 = scmp.eq.s32.totalorder %s169, 0
    %s172 = sadd.s32 %s171, 1
    %s173 = scalar_select %p170, %s171, %s172
    %p176 = pneg %p170
    %p177 = scmp.eq.s32.totalorder %s11, 3
    %p178 = por %p176, %p177
    %p179 = scmp.ne.s32.totalorder %s171, %s174
    %p180 = scmp.eq.s32.totalorder %s11, 0
    %p181 = por %p179, %p180
    %p182 = scmp.ne.s32.totalorder %s171, %s174
    %p183 = scmp.eq.s32.totalorder %s16, 3
    %p184 = por %p182, %p183
    %p185 = scmp.ne.s32.totalorder %s174, %s175
    %p186 = scmp.eq.s32.totalorder %s16, 0
    %p187 = por %p185, %p186
    %p188 = scmp.ne.s32.totalorder %s174, %s175
    %p189 = scmp.eq.s32.totalorder %s17, 3
    %p190 = por %p188, %p189
    %p192 = scmp.ne.s32.totalorder %s175, %s191
    %p193 = scmp.eq.s32.totalorder %s17, 0
    %p194 = por %p192, %p193
    %p195 = scmp.le.s32.totalorder 1, %s11
    %p196 = scmp.lt.s32.totalorder %s11, 5
    %p197 = pnand %p195, %p196
    %p198 = pneg %p197
    // Predicated region
    $region9: #{repconv_forward.1} parent=5 // pred_check
      _
    $region10: #{repconv_forward.1} parent=5 // pred_check_branch
      %200 = sbr.rel (%p197) target = $region12
    $region11: #{repconv_forward.1} parent=5 // pred_region
      %s201 = ssub.s32 %s11, 1
      // Predicated region
      $region13: #{repconv_forward.1} parent=11 // pred_check
        %p202 = pneg %p138
      $region14: #{repconv_forward.1} parent=11 // pred_check_branch
        %204 = sbr.rel (%p202) target = $region16
      $region15: #{repconv_forward.1} parent=11 // pred_region
        _
      $region16: #{repconv_forward.1} parent=11 // pred_fallthru
        _
      // Predicated region
      $region17: #{repconv_forward.1} parent=11 // pred_check
        %p205 = pneg %p159
      $region18: #{repconv_forward.1} parent=11 // pred_check_branch
        %207 = sbr.rel (%p205) target = $region20
      $region19: #{repconv_forward.1} parent=11 // pred_region
        _
      $region20: #{repconv_forward.1} parent=11 // pred_fallthru
        _
    $region12: #{repconv_forward.1} parent=5 // pred_fallthru
      _
    %p208 = scmp.lt.s32.totalorder %s11, 4
    // Predicated region
    $region21: #{repconv_forward.1} parent=5 // pred_check
      %p209 = pneg %p208
    $region22: #{repconv_forward.1} parent=5 // pred_check_branch
      %211 = sbr.rel (%p209) target = $region24
    $region23: #{repconv_forward.1} parent=5 // pred_region
      // Predicated region
      $region25: #{repconv_forward.1} parent=23 // pred_check
        %p212 = pneg %p45
      $region26: #{repconv_forward.1} parent=23 // pred_check_branch
        %214 = sbr.rel (%p212) target = $region28
      $region27: #{repconv_forward.1} parent=23 // pred_region
        %s215 = smul.u32 8, %s19
        %s216 = ssub.s32 18, %s215
        %p217 = scmp.lt.s32.totalorder %s216, 8
        %s218 = scalar_select %p217, %s216, 8
        %s219 = smul.u32 64, %s218
        %s220 = smul.u32 %s219, 3
        %p221 = scmp.lt.s32.totalorder %s18, 1
        %s222 = scalar_select %p221, %s18, 1
        %p223 = scmp.lt.s32.totalorder %s215, 17
        %s224 = scalar_select %p223, %s215, 17
        %s225 = smul.addr %s224, 3
        %s226 = smul.addr %s222, 54
        %s227 = sadd.s32 %s225, %s226
        %s228 = smul.addr %s227, 4
        %s229 = scalar_lea.vmem %s0, %s228
        %s230 = smul.u32 8, %s19
        %s231 = ssub.s32 18, %s230
        %p232 = scmp.lt.s32.totalorder %s231, 8
        %s233 = scalar_select %p232, %s231, 8
        %s234 = smul.u32 64, %s233
        %s235 = smul.u32 %s234, 3
      $region28: #{repconv_forward.1} parent=23 // pred_fallthru
        _
      // Predicated region
      $region29: #{repconv_forward.1} parent=23 // pred_check
        %p236 = pneg %p77
      $region30: #{repconv_forward.1} parent=23 // pred_check_branch
        %238 = sbr.rel (%p236) target = $region32
      $region31: #{repconv_forward.1} parent=23 // pred_region
        %s239 = sadd.s32 %s19, 1
        %s240 = smul.u32 %s239, 8
        %p241 = scmp.lt.s32.totalorder %s18, 1
        %s242 = scalar_select %p241, %s18, 1
        %p243 = scmp.lt.s32.totalorder %s240, 17
        %s244 = scalar_select %p243, %s240, 17
        %s245 = smul.addr %s244, 3
        %s246 = smul.addr %s242, 54
        %s247 = sadd.s32 %s245, %s246
        %s248 = smul.addr %s247, 4
        %s249 = scalar_lea.vmem %s1, %s248
        %s250 = sadd.s32 %s19, 1
        %s251 = smul.u32 %s250, 8
      $region32: #{repconv_forward.1} parent=23 // pred_fallthru
        _
      // Predicated region
      $region33: #{repconv_forward.1} parent=23 // pred_check
        %p252 = pneg %p111
      $region34: #{repconv_forward.1} parent=23 // pred_check_branch
        %254 = sbr.rel (%p252) target = $region36
      $region35: #{repconv_forward.1} parent=23 // pred_region
        %s255 = sadd.s32 %s19, 1
        %s256 = smul.u32 %s255, 8
        %s257 = sadd.s32 %s256, 1
        %p258 = scmp.lt.s32.totalorder %s18, 1
        %s259 = scalar_select %p258, %s18, 1
        %p260 = scmp.lt.s32.totalorder %s257, 17
        %s261 = scalar_select %p260, %s257, 17
        %s262 = smul.addr %s261, 3
        %s263 = smul.addr %s259, 54
        %s264 = sadd.s32 %s262, %s263
        %s265 = smul.addr %s264, 4
        %s266 = scalar_lea.vmem %s2, %s265
        %s267 = sadd.s32 %s19, 1
        %s268 = smul.u32 %s267, 8
        %s269 = sadd.s32 %s268, 1
      $region36: #{repconv_forward.1} parent=23 // pred_fallthru
        _
    $region24: #{repconv_forward.1} parent=5 // pred_fallthru
      _
    %p270 = scmp.le.s32.totalorder 1, %s11
    %p271 = scmp.lt.s32.totalorder %s11, 5
    %p272 = pnand %p270, %p271
    %p273 = pneg %p272
    // Predicated region
    $region37: #{repconv_forward.1} parent=5 // pred_check
      _
    $region38: #{repconv_forward.1} parent=5 // pred_check_branch
      %275 = sbr.rel (%p272) target = $region40
    $region39: #{repconv_forward.1} parent=5 // pred_region
      %s276 = ssub.s32 %s11, 1
      %s277 = smul.u32 8, %s21
      %s278 = ssub.s32 18, %s277
      %p279 = scmp.lt.s32.totalorder %s278, 8
      %s280 = scalar_select %p279, %s278, 8
      %s281 = smul.u32 64, %s280
      %s282 = smul.u32 %s281, 3
      %p283 = scmp.lt.s32.totalorder %s20, 1
      %s284 = scalar_select %p283, %s20, 1
      %p285 = scmp.lt.s32.totalorder %s277, 17
      %s286 = scalar_select %p285, %s277, 17
      %s287 = smul.addr %s286, 3
      %s288 = smul.addr %s284, 54
      %s289 = sadd.s32 %s287, %s288
      %s290 = smul.addr %s289, 4
      %s291 = scalar_lea.vmem %s0, %s290
      %p292 = pneg %p51
      %p293 = pneg %p48
      %s294 = sadd.s32 %s21, 1
      %s295 = smul.u32 %s294, 8
      %p296 = scmp.lt.s32.totalorder %s20, 1
      %s297 = scalar_select %p296, %s20, 1
      %p298 = scmp.lt.s32.totalorder %s295, 17
      %s299 = scalar_select %p298, %s295, 17
      %s300 = smul.addr %s299, 3
      %s301 = smul.addr %s297, 54
      %s302 = sadd.s32 %s300, %s301
      %s303 = smul.addr %s302, 4
      %s304 = scalar_lea.vmem %s1, %s303
      %p305 = pneg %p83
      %p306 = pneg %p80
      %s307 = sadd.s32 %s21, 1
      %s308 = smul.u32 %s307, 8
      %s309 = sadd.s32 %s308, 1
      %p310 = scmp.lt.s32.totalorder %s20, 1
      %s311 = scalar_select %p310, %s20, 1
      %p312 = scmp.lt.s32.totalorder %s309, 17
      %s313 = scalar_select %p312, %s309, 17
      %s314 = smul.addr %s313, 3
      %s315 = smul.addr %s311, 54
      %s316 = sadd.s32 %s314, %s315
      %s317 = smul.addr %s316, 4
      %s318 = scalar_lea.vmem %s2, %s317
      %p319 = pneg %p117
      %p320 = pneg %p114
      %p321 = pneg %p138
      %p322 = pneg %p135
      %p323 = pneg %p159
      %p324 = pneg %p156
      %p325 = pneg %p187
      %p326 = pneg %p184
      %s327 = smul.u32 8, %s21
      %p328 = scmp.lt.s32.totalorder %s20, 1
      %s329 = scalar_select %p328, %s20, 1
      %p330 = scmp.lt.s32.totalorder %s327, 15
      %s331 = scalar_select %p330, %s327, 15
      %s332 = smul.addr %s331, 2
      %s333 = smul.addr %s329, 32
      %s334 = sadd.s32 %s332, %s333
      %s335 = smul.addr %s334, 8
      %s336 = scalar_lea.vmem %s5, %s335
      %s337 = smul.u32 8, %s21
      %s338 = ssub.s32 18, %s337
      %p339 = scmp.lt.s32.totalorder %s338, 8
      %s340 = scalar_select %p339, %s338, 8
      %s341 = smul.u32 64, %s340
      %s342 = smul.u32 %s341, 3
      %p343 = scmp.lt.s32.totalorder %s20, 1
      %s344 = scalar_select %p343, %s20, 1
      %p345 = scmp.lt.s32.totalorder %s337, 17
      %s346 = scalar_select %p345, %s337, 17
      %s347 = smul.addr %s346, 3
      %s348 = smul.addr %s344, 54
      %s349 = sadd.s32 %s347, %s348
      %s350 = smul.addr %s349, 4
      %s351 = scalar_lea.vmem %s0, %s350
      %s352 = smul.u32 8, %s21
      %s353 = ssub.s32 18, %s352
      %p354 = scmp.lt.s32.totalorder %s353, 8
      %s355 = scalar_select %p354, %s353, 8
      %s356 = smul.u32 64, %s355
      %s357 = smul.u32 %s356, 3
      %s358 = sadd.s32 %s21, 1
      %s359 = smul.u32 %s358, 8
      %p360 = scmp.lt.s32.totalorder %s20, 1
      %s361 = scalar_select %p360, %s20, 1
      %p362 = scmp.lt.s32.totalorder %s359, 17
      %s363 = scalar_select %p362, %s359, 17
      %s364 = smul.addr %s363, 3
      %s365 = smul.addr %s361, 54
      %s366 = sadd.s32 %s364, %s365
      %s367 = smul.addr %s366, 4
      %s368 = scalar_lea.vmem %s1, %s367
      %s369 = sadd.s32 %s21, 1
      %s370 = smul.u32 %s369, 8
      %s371 = sadd.s32 %s21, 1
      %s372 = smul.u32 %s371, 8
      %s373 = sadd.s32 %s372, 1
      %p374 = scmp.lt.s32.totalorder %s20, 1
      %s375 = scalar_select %p374, %s20, 1
      %p376 = scmp.lt.s32.totalorder %s373, 17
      %s377 = scalar_select %p376, %s373, 17
      %s378 = smul.addr %s377, 3
      %s379 = smul.addr %s375, 54
      %s380 = sadd.s32 %s378, %s379
      %s381 = smul.addr %s380, 4
      %s382 = scalar_lea.vmem %s2, %s381
      %s383 = sadd.s32 %s21, 1
      %s384 = smul.u32 %s383, 8
      %s385 = sadd.s32 %s384, 1
      %s386 = smul.u32 8, %s21
      %p387 = scmp.lt.s32.totalorder %s20, 1
      %s388 = scalar_select %p387, %s20, 1
      %p389 = scmp.lt.s32.totalorder %s386, 15
      %s390 = scalar_select %p389, %s386, 15
      %s391 = smul.addr %s390, 2
      %s392 = smul.addr %s388, 32
      %s393 = sadd.s32 %s391, %s392
      %s394 = smul.addr %s393, 8
      %s395 = scalar_lea.vmem %s5, %s394
      %s396 = smul.u32 8, %s21
      %v398 = vld [vmem:[%s351] sm:$0xf]
      %v399 = vld [vmem:[%s351 + $0x4] sm:$0xf]
      %v400 = vld [vmem:[%s351 + $0x8] sm:$0xf]
      %v401 = vld [vmem:[%s351 + $0xc] sm:$0xf]
      %v402 = vld [vmem:[%s351 + $0x10] sm:$0xf]
      %v403 = vld [vmem:[%s351 + $0x14] sm:$0xf]
      %v404 = vld [vmem:[%s351 + $0x18] sm:$0xf]
      %v405 = vld [vmem:[%s351 + $0x1c] sm:$0xf]
      %v406 = vld [vmem:[%s351 + $0x20] sm:$0xf]
      %v407 = vld [vmem:[%s351 + $0x24] sm:$0xf]
      %v408 = vld [vmem:[%s351 + $0x28] sm:$0xf]
      %v409 = vld [vmem:[%s351 + $0x2c] sm:$0xf]
      %v410 = vld [vmem:[%s351 + $0x30] sm:$0xf]
      %v411 = vld [vmem:[%s351 + $0x34] sm:$0xf]
      %v412 = vld [vmem:[%s351 + $0x38] sm:$0xf]
      %v413 = vld [vmem:[%s351 + $0x3c] sm:$0xf]
      %v414 = vld [vmem:[%s351 + $0x40] sm:$0xf]
      %v415 = vld [vmem:[%s351 + $0x44] sm:$0xf]
      %v416 = vld [vmem:[%s351 + $0x48] sm:$0xf]
      %v417 = vld [vmem:[%s351 + $0x4c] sm:$0xf]
      %v418 = vld [vmem:[%s351 + $0x50] sm:$0xf]
      %v419 = vld [vmem:[%s351 + $0x54] sm:$0xf]
      %v420 = vld [vmem:[%s351 + $0x58] sm:$0xf]
      %v421 = vld [vmem:[%s351 + $0x5c] sm:$0xf]
      %v422 = vld [vmem:[%s368] sm:$0xf]
      %v423 = vld [vmem:[%s368 + $0x4] sm:$0xf]
      %v424 = vld [vmem:[%s368 + $0x8] sm:$0xf]
      %v425 = vld [vmem:[%s382] sm:$0xf]
      %v426 = vld [vmem:[%s382 + $0x4] sm:$0xf]
      %v427 = vld [vmem:[%s382 + $0x8] sm:$0xf]
      %v452 = vunpack.c.l.b16 %v398
      %v453 = vunpack.c.l.b16 %v399
      %v454 = vunpack.c.l.b16 %v400
      %v455 = vunpack.c.l.b16 %v401
      %v456 = vunpack.c.l.b16 %v402
      %v457 = vunpack.c.l.b16 %v403
      %v458 = vunpack.c.l.b16 %v404
      %v459 = vunpack.c.l.b16 %v405
      %v460 = vunpack.c.l.b16 %v406
      %v461 = vunpack.c.l.b16 %v407
      %v462 = vunpack.c.l.b16 %v408
      %v463 = vunpack.c.l.b16 %v409
      %v464 = vunpack.c.l.b16 %v410
      %v465 = vunpack.c.l.b16 %v411
      %v466 = vunpack.c.l.b16 %v412
      %v467 = vunpack.c.l.b16 %v413
      %v468 = vunpack.c.l.b16 %v414
      %v469 = vunpack.c.l.b16 %v415
      %v470 = vunpack.c.l.b16 %v416
      %v471 = vunpack.c.l.b16 %v417
      %v472 = vunpack.c.l.b16 %v418
      %v473 = vunpack.c.l.b16 %v419
      %v474 = vunpack.c.l.b16 %v420
      %v475 = vunpack.c.l.b16 %v421
      %v476 = vpack.c.b16 %v453, %v452
      %v477 = vpack.c.b16 %v455, %v454
      %v478 = vpack.c.b16 %v457, %v456
      %v479 = vpack.c.b16 %v459, %v458
      %v480 = vpack.c.b16 %v461, %v460
      %v481 = vpack.c.b16 %v463, %v462
      %v482 = vpack.c.b16 %v465, %v464
      %v483 = vpack.c.b16 %v467, %v466
      %v484 = vpack.c.b16 %v469, %v468
      %v485 = vpack.c.b16 %v471, %v470
      %v486 = vpack.c.b16 %v473, %v472
      %v487 = vpack.c.b16 %v475, %v474
      %v489 = vunpack.c.l.b16 %v422
      %v490 = vpack.c.b16 %v489, %v489
      %vm491 = vsmask.f32 7424
      %v493 = vshrl.u32 %v476, 16
      %v495 = vshll.u32 %v476, 16
      %v497 = vrot.slane %v495, 1
      %v498 = vor.u32 %v493, %v497
      %v500 = vshll.u32 %v477, 16
      %v502 = vrot.slane %v500, 1
      %v503 = vsel %vm491, %v498, %v502
      %v504 = vshrl.u32 %v477, 16
      %v506 = vor.u32 %v504, %v502
      %v508 = vshll.u32 %v478, 16
      %v510 = vrot.slane %v508, 1
      %v511 = vsel %vm491, %v506, %v510
      %v512 = vshrl.u32 %v478, 16
      %v514 = vor.u32 %v512, %v510
      %v516 = vshll.u32 %v479, 16
      %v518 = vrot.slane %v516, 1
      %v519 = vsel %vm491, %v514, %v518
      %v520 = vshrl.u32 %v479, 16
      %v522 = vor.u32 %v520, %v518
      %v524 = vshll.u32 %v480, 16
      %v526 = vrot.slane %v524, 1
      %v527 = vsel %vm491, %v522, %v526
      %v528 = vshrl.u32 %v480, 16
      %v530 = vor.u32 %v528, %v526
      %v532 = vshll.u32 %v481, 16
      %v534 = vrot.slane %v532, 1
      %v535 = vsel %vm491, %v530, %v534
      %v536 = vshrl.u32 %v481, 16
      %v538 = vor.u32 %v536, %v534
      %v540 = vshll.u32 %v482, 16
      %v542 = vrot.slane %v540, 1
      %v543 = vsel %vm491, %v538, %v542
      %v544 = vshrl.u32 %v482, 16
      %v546 = vor.u32 %v544, %v542
      %v548 = vshll.u32 %v483, 16
      %v550 = vrot.slane %v548, 1
      %v551 = vsel %vm491, %v546, %v550
      %v552 = vshrl.u32 %v483, 16
      %v554 = vor.u32 %v552, %v550
      %v556 = vshll.u32 %v484, 16
      %v558 = vrot.slane %v556, 1
      %v559 = vsel %vm491, %v554, %v558
      %v560 = vshrl.u32 %v484, 16
      %v562 = vor.u32 %v560, %v558
      %v564 = vshll.u32 %v485, 16
      %v566 = vrot.slane %v564, 1
      %v567 = vsel %vm491, %v562, %v566
      %v568 = vshrl.u32 %v485, 16
      %v570 = vor.u32 %v568, %v566
      %v572 = vshll.u32 %v486, 16
      %v574 = vrot.slane %v572, 1
      %v575 = vsel %vm491, %v570, %v574
      %v576 = vshrl.u32 %v486, 16
      %v578 = vor.u32 %v576, %v574
      %v580 = vshll.u32 %v487, 16
      %v582 = vrot.slane %v580, 1
      %v583 = vsel %vm491, %v578, %v582
      %v584 = vshrl.u32 %v487, 16
      %v586 = vor.u32 %v584, %v582
      %v588 = vshll.u32 %v490, 16
      %v590 = vrot.slane %v588, 1
      %v591 = vsel %vm491, %v586, %v590
      %592 = vrot.lane.b32.xlu0 %v503, 4
      %v593 = vpop.permute.xlu0 %592
      %594 = vrot.lane.b32.xlu0 %v511, 4
      %v595 = vpop.permute.xlu0 %594
      %596 = vrot.lane.b32.xlu0 %v519, 4
      %v597 = vpop.permute.xlu0 %596
      %598 = vrot.lane.b32.xlu0 %v527, 4
      %v599 = vpop.permute.xlu0 %598
      %600 = vrot.lane.b32.xlu0 %v535, 4
      %v601 = vpop.permute.xlu0 %600
      %602 = vrot.lane.b32.xlu0 %v543, 4
      %v603 = vpop.permute.xlu0 %602
      %604 = vrot.lane.b32.xlu0 %v551, 4
      %v605 = vpop.permute.xlu0 %604
      %606 = vrot.lane.b32.xlu0 %v559, 4
      %v607 = vpop.permute.xlu0 %606
      %608 = vrot.lane.b32.xlu0 %v567, 4
      %v609 = vpop.permute.xlu0 %608
      %610 = vrot.lane.b32.xlu0 %v575, 4
      %v611 = vpop.permute.xlu0 %610
      %612 = vrot.lane.b32.xlu0 %v583, 4
      %v613 = vpop.permute.xlu0 %612
      %614 = vrot.lane.b32.xlu0 %v591, 4
      %v615 = vpop.permute.xlu0 %614
      %vm616 = vcmask 1046528
      %v617 = vrot.slane %v476, 1
      %v618 = vrot.slane %v477, 1
      %v619 = vsel %vm616, %v617, %v618
      %v620 = vrot.slane %v478, 1
      %v621 = vsel %vm616, %v618, %v620
      %v622 = vrot.slane %v479, 1
      %v623 = vsel %vm616, %v620, %v622
      %v624 = vrot.slane %v480, 1
      %v625 = vsel %vm616, %v622, %v624
      %v626 = vrot.slane %v481, 1
      %v627 = vsel %vm616, %v624, %v626
      %v628 = vrot.slane %v482, 1
      %v629 = vsel %vm616, %v626, %v628
      %v630 = vrot.slane %v483, 1
      %v631 = vsel %vm616, %v628, %v630
      %v632 = vrot.slane %v484, 1
      %v633 = vsel %vm616, %v630, %v632
      %v634 = vrot.slane %v485, 1
      %v635 = vsel %vm616, %v632, %v634
      %v636 = vrot.slane %v486, 1
      %v637 = vsel %vm616, %v634, %v636
      %v638 = vrot.slane %v487, 1
      %v639 = vsel %vm616, %v636, %v638
      %v640 = vrot.slane %v490, 1
      %v641 = vsel %vm616, %v638, %v640
      %642 = vrot.lane.b32.xlu0 %v619, 8
      %v643 = vpop.permute.xlu0 %642
      %644 = vrot.lane.b32.xlu0 %v621, 8
      %v645 = vpop.permute.xlu0 %644
      %646 = vrot.lane.b32.xlu0 %v623, 8
      %v647 = vpop.permute.xlu0 %646
      %648 = vrot.lane.b32.xlu0 %v625, 8
      %v649 = vpop.permute.xlu0 %648
      %650 = vrot.lane.b32.xlu0 %v627, 8
      %v651 = vpop.permute.xlu0 %650
      %652 = vrot.lane.b32.xlu0 %v629, 8
      %v653 = vpop.permute.xlu0 %652
      %654 = vrot.lane.b32.xlu0 %v631, 8
      %v655 = vpop.permute.xlu0 %654
      %656 = vrot.lane.b32.xlu0 %v633, 8
      %v657 = vpop.permute.xlu0 %656
      %658 = vrot.lane.b32.xlu0 %v635, 8
      %v659 = vpop.permute.xlu0 %658
      %660 = vrot.lane.b32.xlu0 %v637, 8
      %v661 = vpop.permute.xlu0 %660
      %662 = vrot.lane.b32.xlu0 %v639, 8
      %v663 = vpop.permute.xlu0 %662
      %664 = vrot.lane.b32.xlu0 %v641, 8
      %v665 = vpop.permute.xlu0 %664
      %vm666 = vcmask 31744
      %v668 = vsel %vm666, %v476, %v593
      %v670 = vsel %vm666, %v477, %v595
      %v672 = vsel %vm666, %v478, %v597
      %v674 = vsel %vm666, %v479, %v599
      %v676 = vsel %vm666, %v480, %v601
      %v678 = vsel %vm666, %v481, %v603
      %v680 = vsel %vm666, %v482, %v605
      %v682 = vsel %vm666, %v483, %v607
      %v684 = vsel %vm666, %v484, %v609
      %v686 = vsel %vm666, %v485, %v611
      %v688 = vsel %vm666, %v486, %v613
      %v690 = vsel %vm666, %v487, %v615
      %vm691 = vcmask 64512
      %v693 = vsel %vm691, %v668, %v643
      %v695 = vsel %vm691, %v670, %v645
      %v697 = vsel %vm691, %v672, %v647
      %v699 = vsel %vm691, %v674, %v649
      %v701 = vsel %vm691, %v676, %v651
      %v703 = vsel %vm691, %v678, %v653
      %v705 = vsel %vm691, %v680, %v655
      %v707 = vsel %vm691, %v682, %v657
      %v709 = vsel %vm691, %v684, %v659
      %v711 = vsel %vm691, %v686, %v661
      %v713 = vsel %vm691, %v688, %v663
      %v715 = vsel %vm691, %v690, %v665
      %v716 = vld [vmem:[%s3] sm:$0xf]
      %v717 = vld [vmem:[%s3 + $0x4] sm:$0x3]
      %v720 = vunpack.c.l.b16 %v423
      %v721 = vunpack.c.l.b16 %v424
      %v722 = vpack.c.b16 %v456, %v455
      %v723 = vpack.c.b16 %v458, %v457
      %v724 = vpack.c.b16 %v460, %v459
      %v725 = vpack.c.b16 %v462, %v461
      %v726 = vpack.c.b16 %v464, %v463
      %v727 = vpack.c.b16 %v466, %v465
      %v728 = vpack.c.b16 %v468, %v467
      %v729 = vpack.c.b16 %v470, %v469
      %v730 = vpack.c.b16 %v472, %v471
      %v731 = vpack.c.b16 %v474, %v473
      %v732 = vpack.c.b16 %v489, %v475
      %v733 = vpack.c.b16 %v721, %v720
      %v735 = vunpack.c.l.b16 %v425
      %v736 = vpack.c.b16 %v735, %v735
      %v738 = vshrl.u32 %v722, 16
      %v740 = vshll.u32 %v722, 16
      %v742 = vrot.slane %v740, 1
      %v743 = vor.u32 %v738, %v742
      %v745 = vshll.u32 %v723, 16
      %v747 = vrot.slane %v745, 1
      %v748 = vsel %vm491, %v743, %v747
      %v749 = vshrl.u32 %v723, 16
      %v751 = vor.u32 %v749, %v747
      %v753 = vshll.u32 %v724, 16
      %v755 = vrot.slane %v753, 1
      %v756 = vsel %vm491, %v751, %v755
      %v757 = vshrl.u32 %v724, 16
      %v759 = vor.u32 %v757, %v755
      %v761 = vshll.u32 %v725, 16
      %v763 = vrot.slane %v761, 1
      %v764 = vsel %vm491, %v759, %v763
      %v765 = vshrl.u32 %v725, 16
      %v767 = vor.u32 %v765, %v763
      %v769 = vshll.u32 %v726, 16
      %v771 = vrot.slane %v769, 1
      %v772 = vsel %vm491, %v767, %v771
      %v773 = vshrl.u32 %v726, 16
      %v775 = vor.u32 %v773, %v771
      %v777 = vshll.u32 %v727, 16
      %v779 = vrot.slane %v777, 1
      %v780 = vsel %vm491, %v775, %v779
      %v781 = vshrl.u32 %v727, 16
      %v783 = vor.u32 %v781, %v779
      %v785 = vshll.u32 %v728, 16
      %v787 = vrot.slane %v785, 1
      %v788 = vsel %vm491, %v783, %v787
      %v789 = vshrl.u32 %v728, 16
      %v791 = vor.u32 %v789, %v787
      %v793 = vshll.u32 %v729, 16
      %v795 = vrot.slane %v793, 1
      %v796 = vsel %vm491, %v791, %v795
      %v797 = vshrl.u32 %v729, 16
      %v799 = vor.u32 %v797, %v795
      %v801 = vshll.u32 %v730, 16
      %v803 = vrot.slane %v801, 1
      %v804 = vsel %vm491, %v799, %v803
      %v805 = vshrl.u32 %v730, 16
      %v807 = vor.u32 %v805, %v803
      %v809 = vshll.u32 %v731, 16
      %v811 = vrot.slane %v809, 1
      %v812 = vsel %vm491, %v807, %v811
      %v813 = vshrl.u32 %v731, 16
      %v815 = vor.u32 %v813, %v811
      %v817 = vshll.u32 %v732, 16
      %v819 = vrot.slane %v817, 1
      %v820 = vsel %vm491, %v815, %v819
      %v821 = vshrl.u32 %v732, 16
      %v823 = vor.u32 %v821, %v819
      %v825 = vshll.u32 %v733, 16
      %v827 = vrot.slane %v825, 1
      %v828 = vsel %vm491, %v823, %v827
      %v829 = vshrl.u32 %v733, 16
      %v831 = vor.u32 %v829, %v827
      %v833 = vshll.u32 %v736, 16
      %v835 = vrot.slane %v833, 1
      %v836 = vsel %vm491, %v831, %v835
      %837 = vrot.lane.b32.xlu0 %v748, 4
      %v838 = vpop.permute.xlu0 %837
      %839 = vrot.lane.b32.xlu0 %v756, 4
      %v840 = vpop.permute.xlu0 %839
      %841 = vrot.lane.b32.xlu0 %v764, 4
      %v842 = vpop.permute.xlu0 %841
      %843 = vrot.lane.b32.xlu0 %v772, 4
      %v844 = vpop.permute.xlu0 %843
      %845 = vrot.lane.b32.xlu0 %v780, 4
      %v846 = vpop.permute.xlu0 %845
      %847 = vrot.lane.b32.xlu0 %v788, 4
      %v848 = vpop.permute.xlu0 %847
      %849 = vrot.lane.b32.xlu0 %v796, 4
      %v850 = vpop.permute.xlu0 %849
      %851 = vrot.lane.b32.xlu0 %v804, 4
      %v852 = vpop.permute.xlu0 %851
      %853 = vrot.lane.b32.xlu0 %v812, 4
      %v854 = vpop.permute.xlu0 %853
      %855 = vrot.lane.b32.xlu0 %v820, 4
      %v856 = vpop.permute.xlu0 %855
      %857 = vrot.lane.b32.xlu0 %v828, 4
      %v858 = vpop.permute.xlu0 %857
      %859 = vrot.lane.b32.xlu0 %v836, 4
      %v860 = vpop.permute.xlu0 %859
      %v861 = vrot.slane %v722, 1
      %v862 = vrot.slane %v723, 1
      %v863 = vsel %vm616, %v861, %v862
      %v864 = vrot.slane %v724, 1
      %v865 = vsel %vm616, %v862, %v864
      %v866 = vrot.slane %v725, 1
      %v867 = vsel %vm616, %v864, %v866
      %v868 = vrot.slane %v726, 1
      %v869 = vsel %vm616, %v866, %v868
      %v870 = vrot.slane %v727, 1
      %v871 = vsel %vm616, %v868, %v870
      %v872 = vrot.slane %v728, 1
      %v873 = vsel %vm616, %v870, %v872
      %v874 = vrot.slane %v729, 1
      %v875 = vsel %vm616, %v872, %v874
      %v876 = vrot.slane %v730, 1
      %v877 = vsel %vm616, %v874, %v876
      %v878 = vrot.slane %v731, 1
      %v879 = vsel %vm616, %v876, %v878
      %v880 = vrot.slane %v732, 1
      %v881 = vsel %vm616, %v878, %v880
      %v882 = vrot.slane %v733, 1
      %v883 = vsel %vm616, %v880, %v882
      %v884 = vrot.slane %v736, 1
      %v885 = vsel %vm616, %v882, %v884
      %886 = vrot.lane.b32.xlu0 %v863, 8
      %v887 = vpop.permute.xlu0 %886
      %888 = vrot.lane.b32.xlu0 %v865, 8
      %v889 = vpop.permute.xlu0 %888
      %890 = vrot.lane.b32.xlu0 %v867, 8
      %v891 = vpop.permute.xlu0 %890
      %892 = vrot.lane.b32.xlu0 %v869, 8
      %v893 = vpop.permute.xlu0 %892
      %894 = vrot.lane.b32.xlu0 %v871, 8
      %v895 = vpop.permute.xlu0 %894
      %896 = vrot.lane.b32.xlu0 %v873, 8
      %v897 = vpop.permute.xlu0 %896
      %898 = vrot.lane.b32.xlu0 %v875, 8
      %v899 = vpop.permute.xlu0 %898
      %900 = vrot.lane.b32.xlu0 %v877, 8
      %v901 = vpop.permute.xlu0 %900
      %902 = vrot.lane.b32.xlu0 %v879, 8
      %v903 = vpop.permute.xlu0 %902
      %904 = vrot.lane.b32.xlu0 %v881, 8
      %v905 = vpop.permute.xlu0 %904
      %906 = vrot.lane.b32.xlu0 %v883, 8
      %v907 = vpop.permute.xlu0 %906
      %908 = vrot.lane.b32.xlu0 %v885, 8
      %v909 = vpop.permute.xlu0 %908
      %v911 = vsel %vm666, %v722, %v838
      %v913 = vsel %vm666, %v723, %v840
      %v915 = vsel %vm666, %v724, %v842
      %v917 = vsel %vm666, %v725, %v844
      %v919 = vsel %vm666, %v726, %v846
      %v921 = vsel %vm666, %v727, %v848
      %v923 = vsel %vm666, %v728, %v850
      %v925 = vsel %vm666, %v729, %v852
      %v927 = vsel %vm666, %v730, %v854
      %v929 = vsel %vm666, %v731, %v856
      %v931 = vsel %vm666, %v732, %v858
      %v933 = vsel %vm666, %v733, %v860
      %v935 = vsel %vm691, %v911, %v887
      %v937 = vsel %vm691, %v913, %v889
      %v939 = vsel %vm691, %v915, %v891
      %v941 = vsel %vm691, %v917, %v893
      %v943 = vsel %vm691, %v919, %v895
      %v945 = vsel %vm691, %v921, %v897
      %v947 = vsel %vm691, %v923, %v899
      %v949 = vsel %vm691, %v925, %v901
      %v951 = vsel %vm691, %v927, %v903
      %v953 = vsel %vm691, %v929, %v905
      %v955 = vsel %vm691, %v931, %v907
      %v957 = vsel %vm691, %v933, %v909
      %s958 = scalar_lea.vmem %s3, 8
      %v959 = vld [vmem:[%s958] sm:$0xf]
      %v960 = vld [vmem:[%s958 + $0x4] sm:$0x3]
      %v963 = vunpack.c.l.b16 %v959
      %v964 = vunpack.c.l.b16 %v960
      %v965 = vpack.c.b16 %v964, %v963
      %vm966 = vcmask 97280
      %v967 = vsel %vm966, %v935, 0
      %v969 = vsel %vm966, %v937, 0
      %v971 = vsel %vm966, %v939, 0
      %v973 = vsel %vm966, %v941, 0
      %v975 = vsel %vm966, %v943, 0
      %v977 = vsel %vm966, %v945, 0
      %v979 = vsel %vm966, %v947, 0
      %v981 = vsel %vm966, %v949, 0
      %v983 = vsel %vm966, %v951, 0
      %v985 = vsel %vm966, %v953, 0
      %v987 = vsel %vm966, %v955, 0
      %v989 = vsel %vm966, %v957, 0
      %vm991 = vcmask 1045504
      %v993 = vsel %vm991, %v965, 0
      %995 = vmatprep.subr.bf16.mxu0 0
      %996 = vmatpush1.bf16.msra.mxu0 0
      %997 = vmatprep.subr.bf16.mxu0 0
      %998 = vmatpush1.bf16.msra.mxu0 0
      %999 = vmatprep.subr.bf16.mxu0 0
      %1000 = vmatpush1.bf16.msra.mxu0 0
      %1001 = vmatprep.subr.bf16.mxu0 0
      %1002 = vmatpush1.bf16.msra.mxu0 0
      %1003 = vmatprep.subr.bf16.mxu0 0
      %1004 = vmatpush1.bf16.msra.mxu0 0
      %1005 = vmatprep.subr.bf16.mxu0 0
      %1006 = vmatpush1.bf16.msra.mxu0 0
      %1007 = vmatprep.subr.bf16.mxu0 0
      %1008 = vmatpush1.bf16.msra.mxu0 0
      %1009 = vmatprep.subr.bf16.mxu0 0
      %1010 = vmatpush1.bf16.msra.mxu0 %v993
      %1011 = vmatprep.subr.bf16.mxu0 0
      %1012 = vmatpush2.bf16.msra.mxu0 0
      %1013 = vmatprep.subr.bf16.mxu0 0
      %1014 = vmatpush2.bf16.msra.mxu0 0
      %1015 = vmatprep.subr.bf16.mxu0 0
      %1016 = vmatpush2.bf16.msra.mxu0 0
      %1017 = vmatprep.subr.bf16.mxu0 0
      %1018 = vmatpush2.bf16.msra.mxu0 0
      %1019 = vmatprep.subr.bf16.mxu0 0
      %1020 = vmatpush2.bf16.msra.mxu0 0
      %1021 = vmatprep.subr.bf16.mxu0 0
      %1022 = vmatpush2.bf16.msra.mxu0 0
      %1023 = vmatprep.subr.bf16.mxu0 0
      %1024 = vmatpush2.bf16.msra.mxu0 0
      %1025 = vmatprep.subr.bf16.mxu0 0
      %1026 = vmatpush2.bf16.msra.mxu0 0
      %1027 = vmatprep.mubr.bf16.mxu0 0
      %1028 = vmatmul.mubr.bf16.gmra.mxu0 %v967
      %v1029 = vpop.f32.mrf.mxu0
      %v1030 = vadd.f32 0.0, %v1029
      %v1031 = vpop.f32.mrf.mxu0
      %v1032 = vpop.f32.mrf.mxu0
      %v1033 = vadd.f32 0.0, %v1032
      %v1034 = vpop.f32.mrf.mxu0
      %1035 = vmatprep.mubr.bf16.mxu0 0
      %1036 = vmatmul.mubr.bf16.gmra.mxu0 %v969
      %v1037 = vpop.f32.mrf.mxu0
      %v1038 = vpop.f32.mrf.mxu0
      %v1039 = vpop.f32.mrf.mxu0
      %v1040 = vadd.f32 0.0, %v1039
      %v1041 = vpop.f32.mrf.mxu0
      %1042 = vmatprep.mubr.bf16.mxu0 0
      %1043 = vmatmul.mubr.bf16.gmra.mxu0 %v971
      %v1044 = vpop.f32.mrf.mxu0
      %v1045 = vadd.f32 0.0, %v1044
      %v1046 = vpop.f32.mrf.mxu0
      %v1047 = vpop.f32.mrf.mxu0
      %v1048 = vpop.f32.mrf.mxu0
      %1049 = vmatprep.mubr.bf16.mxu0 0
      %1050 = vmatmul.mubr.bf16.gmra.mxu0 %v973
      %v1051 = vpop.f32.mrf.mxu0
      %v1052 = vadd.f32 0.0, %v1051
      %v1053 = vpop.f32.mrf.mxu0
      %v1054 = vpop.f32.mrf.mxu0
      %v1055 = vadd.f32 0.0, %v1054
      %v1056 = vpop.f32.mrf.mxu0
      %1057 = vmatprep.mubr.bf16.mxu0 0
      %1058 = vmatmul.mubr.bf16.gmra.mxu0 %v975
      %v1059 = vpop.f32.mrf.mxu0
      %v1060 = vpop.f32.mrf.mxu0
      %v1061 = vpop.f32.mrf.mxu0
      %v1062 = vadd.f32 0.0, %v1061
      %v1063 = vpop.f32.mrf.mxu0
      %1064 = vmatprep.mubr.bf16.mxu0 0
      %1065 = vmatmul.mubr.bf16.gmra.mxu0 %v977
      %v1066 = vpop.f32.mrf.mxu0
      %v1067 = vadd.f32 0.0, %v1066
      %v1068 = vpop.f32.mrf.mxu0
      %v1069 = vpop.f32.mrf.mxu0
      %v1070 = vpop.f32.mrf.mxu0
      %1071 = vmatprep.mubr.bf16.mxu0 0
      %1072 = vmatmul.mubr.bf16.gmra.mxu0 %v979
      %v1073 = vpop.f32.mrf.mxu0
      %v1074 = vadd.f32 0.0, %v1073
      %v1075 = vpop.f32.mrf.mxu0
      %v1076 = vpop.f32.mrf.mxu0
      %v1077 = vadd.f32 0.0, %v1076
      %v1078 = vpop.f32.mrf.mxu0
      %1079 = vmatprep.mubr.bf16.mxu0 0
      %1080 = vmatmul.mubr.bf16.gmra.mxu0 %v981
      %v1081 = vpop.f32.mrf.mxu0
      %v1082 = vpop.f32.mrf.mxu0
      %v1083 = vpop.f32.mrf.mxu0
      %v1084 = vadd.f32 0.0, %v1083
      %v1085 = vpop.f32.mrf.mxu0
      %1086 = vmatprep.mubr.bf16.mxu0 0
      %1087 = vmatmul.mubr.bf16.gmra.mxu0 %v983
      %v1088 = vpop.f32.mrf.mxu0
      %v1089 = vadd.f32 0.0, %v1088
      %v1090 = vpop.f32.mrf.mxu0
      %v1091 = vpop.f32.mrf.mxu0
      %v1092 = vpop.f32.mrf.mxu0
      %1093 = vmatprep.mubr.bf16.mxu0 0
      %1094 = vmatmul.mubr.bf16.gmra.mxu0 %v985
      %v1095 = vpop.f32.mrf.mxu0
      %v1096 = vadd.f32 0.0, %v1095
      %v1097 = vpop.f32.mrf.mxu0
      %v1098 = vpop.f32.mrf.mxu0
      %v1099 = vadd.f32 0.0, %v1098
      %v1100 = vpop.f32.mrf.mxu0
      %1101 = vmatprep.mubr.bf16.mxu0 0
      %1102 = vmatmul.mubr.bf16.gmra.mxu0 %v987
      %v1103 = vpop.f32.mrf.mxu0
      %v1104 = vpop.f32.mrf.mxu0
      %v1105 = vpop.f32.mrf.mxu0
      %v1106 = vadd.f32 0.0, %v1105
      %v1107 = vpop.f32.mrf.mxu0
      %1108 = vmatprep.mubr.bf16.mxu0 0
      %1109 = vmatmul.mubr.bf16.gmra.mxu0 %v989
      %v1110 = vpop.f32.mrf.mxu0
      %v1111 = vadd.f32 0.0, %v1110
      %v1112 = vpop.f32.mrf.mxu0
      %v1113 = vpop.f32.mrf.mxu0
      %v1114 = vpop.f32.mrf.mxu0
      %1115 = vdwg.mxu0
      %v1118 = vunpack.c.l.b16 %v716
      %v1119 = vunpack.c.l.b16 %v717
      %v1120 = vpack.c.b16 %v1119, %v1118
      %v1121 = vsel %vm966, %v693, 0
      %v1123 = vsel %vm966, %v695, 0
      %v1125 = vsel %vm966, %v697, 0
      %v1127 = vsel %vm966, %v699, 0
      %v1129 = vsel %vm966, %v701, 0
      %v1131 = vsel %vm966, %v703, 0
      %v1133 = vsel %vm966, %v705, 0
      %v1135 = vsel %vm966, %v707, 0
      %v1137 = vsel %vm966, %v709, 0
      %v1139 = vsel %vm966, %v711, 0
      %v1141 = vsel %vm966, %v713, 0
      %v1143 = vsel %vm966, %v715, 0
      %v1146 = vsel %vm991, %v1120, 0
      %1148 = vmatprep.subr.bf16.mxu0 0
      %1149 = vmatpush1.bf16.msra.mxu0 0
      %1150 = vmatprep.subr.bf16.mxu0 0
      %1151 = vmatpush1.bf16.msra.mxu0 0
      %1152 = vmatprep.subr.bf16.mxu0 0
      %1153 = vmatpush1.bf16.msra.mxu0 0
      %1154 = vmatprep.subr.bf16.mxu0 0
      %1155 = vmatpush1.bf16.msra.mxu0 0
      %1156 = vmatprep.subr.bf16.mxu0 0
      %1157 = vmatpush1.bf16.msra.mxu0 0
      %1158 = vmatprep.subr.bf16.mxu0 0
      %1159 = vmatpush1.bf16.msra.mxu0 0
      %1160 = vmatprep.subr.bf16.mxu0 0
      %1161 = vmatpush1.bf16.msra.mxu0 0
      %1162 = vmatprep.subr.bf16.mxu0 0
      %1163 = vmatpush1.bf16.msra.mxu0 %v1146
      %1164 = vmatprep.subr.bf16.mxu0 0
      %1165 = vmatpush2.bf16.msra.mxu0 0
      %1166 = vmatprep.subr.bf16.mxu0 0
      %1167 = vmatpush2.bf16.msra.mxu0 0
      %1168 = vmatprep.subr.bf16.mxu0 0
      %1169 = vmatpush2.bf16.msra.mxu0 0
      %1170 = vmatprep.subr.bf16.mxu0 0
      %1171 = vmatpush2.bf16.msra.mxu0 0
      %1172 = vmatprep.subr.bf16.mxu0 0
      %1173 = vmatpush2.bf16.msra.mxu0 0
      %1174 = vmatprep.subr.bf16.mxu0 0
      %1175 = vmatpush2.bf16.msra.mxu0 0
      %1176 = vmatprep.subr.bf16.mxu0 0
      %1177 = vmatpush2.bf16.msra.mxu0 0
      %1178 = vmatprep.subr.bf16.mxu0 0
      %1179 = vmatpush2.bf16.msra.mxu0 0
      %1180 = vmatprep.mubr.bf16.mxu0 0
      %1181 = vmatmul.mubr.bf16.gmra.mxu0 %v1121
      %v1182 = vpop.f32.mrf.mxu0
      %v1183 = vadd.f32 %v1030, %v1182
      %v1184 = vpop.f32.mrf.mxu0
      %v1185 = vpop.f32.mrf.mxu0
      %v1186 = vadd.f32 %v1033, %v1185
      %v1187 = vpop.f32.mrf.mxu0
      %1188 = vmatprep.mubr.bf16.mxu0 0
      %1189 = vmatmul.mubr.bf16.gmra.mxu0 %v1123
      %v1190 = vpop.f32.mrf.mxu0
      %v1191 = vpop.f32.mrf.mxu0
      %v1192 = vpop.f32.mrf.mxu0
      %v1193 = vadd.f32 %v1040, %v1192
      %v1194 = vpop.f32.mrf.mxu0
      %1195 = vmatprep.mubr.bf16.mxu0 0
      %1196 = vmatmul.mubr.bf16.gmra.mxu0 %v1125
      %v1197 = vpop.f32.mrf.mxu0
      %v1198 = vadd.f32 %v1045, %v1197
      %v1199 = vpop.f32.mrf.mxu0
      %v1200 = vpop.f32.mrf.mxu0
      %v1201 = vpop.f32.mrf.mxu0
      %1202 = vmatprep.mubr.bf16.mxu0 0
      %1203 = vmatmul.mubr.bf16.gmra.mxu0 %v1127
      %v1204 = vpop.f32.mrf.mxu0
      %v1205 = vadd.f32 %v1052, %v1204
      %v1206 = vpop.f32.mrf.mxu0
      %v1207 = vpop.f32.mrf.mxu0
      %v1208 = vadd.f32 %v1055, %v1207
      %v1209 = vpop.f32.mrf.mxu0
      %1210 = vmatprep.mubr.bf16.mxu0 0
      %1211 = vmatmul.mubr.bf16.gmra.mxu0 %v1129
      %v1212 = vpop.f32.mrf.mxu0
      %v1213 = vpop.f32.mrf.mxu0
      %v1214 = vpop.f32.mrf.mxu0
      %v1215 = vadd.f32 %v1062, %v1214
      %v1216 = vpop.f32.mrf.mxu0
      %1217 = vmatprep.mubr.bf16.mxu0 0
      %1218 = vmatmul.mubr.bf16.gmra.mxu0 %v1131
      %v1219 = vpop.f32.mrf.mxu0
      %v1220 = vadd.f32 %v1067, %v1219
      %v1221 = vpop.f32.mrf.mxu0
      %v1222 = vpop.f32.mrf.mxu0
      %v1223 = vpop.f32.mrf.mxu0
      %1224 = vmatprep.mubr.bf16.mxu0 0
      %1225 = vmatmul.mubr.bf16.gmra.mxu0 %v1133
      %v1226 = vpop.f32.mrf.mxu0
      %v1227 = vadd.f32 %v1074, %v1226
      %v1228 = vpop.f32.mrf.mxu0
      %v1229 = vpop.f32.mrf.mxu0
      %v1230 = vadd.f32 %v1077, %v1229
      %v1231 = vpop.f32.mrf.mxu0
      %1232 = vmatprep.mubr.bf16.mxu0 0
      %1233 = vmatmul.mubr.bf16.gmra.mxu0 %v1135
      %v1234 = vpop.f32.mrf.mxu0
      %v1235 = vpop.f32.mrf.mxu0
      %v1236 = vpop.f32.mrf.mxu0
      %v1237 = vadd.f32 %v1084, %v1236
      %v1238 = vpop.f32.mrf.mxu0
      %1239 = vmatprep.mubr.bf16.mxu0 0
      %1240 = vmatmul.mubr.bf16.gmra.mxu0 %v1137
      %v1241 = vpop.f32.mrf.mxu0
      %v1242 = vadd.f32 %v1089, %v1241
      %v1243 = vpop.f32.mrf.mxu0
      %v1244 = vpop.f32.mrf.mxu0
      %v1245 = vpop.f32.mrf.mxu0
      %1246 = vmatprep.mubr.bf16.mxu0 0
      %1247 = vmatmul.mubr.bf16.gmra.mxu0 %v1139
      %v1248 = vpop.f32.mrf.mxu0
      %v1249 = vadd.f32 %v1096, %v1248
      %v1250 = vpop.f32.mrf.mxu0
      %v1251 = vpop.f32.mrf.mxu0
      %v1252 = vadd.f32 %v1099, %v1251
      %v1253 = vpop.f32.mrf.mxu0
      %1254 = vmatprep.mubr.bf16.mxu0 0
      %1255 = vmatmul.mubr.bf16.gmra.mxu0 %v1141
      %v1256 = vpop.f32.mrf.mxu0
      %v1257 = vpop.f32.mrf.mxu0
      %v1258 = vpop.f32.mrf.mxu0
      %v1259 = vadd.f32 %v1106, %v1258
      %v1260 = vpop.f32.mrf.mxu0
      %1261 = vmatprep.mubr.bf16.mxu0 0
      %1262 = vmatmul.mubr.bf16.gmra.mxu0 %v1143
      %v1263 = vpop.f32.mrf.mxu0
      %v1264 = vadd.f32 %v1111, %v1263
      %v1265 = vpop.f32.mrf.mxu0
      %v1266 = vpop.f32.mrf.mxu0
      %v1267 = vpop.f32.mrf.mxu0
      %1268 = vdwg.mxu0
      %v1271 = vunpack.c.l.b16 %v426
      %v1272 = vunpack.c.l.b16 %v427
      %v1273 = vpack.c.b16 %v720, %v489
      %v1274 = vpack.c.b16 %v735, %v721
      %v1275 = vpack.c.b16 %v1272, %v1271
      %v1277 = vunpack.c.l.b16 0
      %v1278 = vpack.c.b16 %v1277, %v1277
      %v1280 = vshll.u32 %v1273, 16
      %v1282 = vrot.slane %v1280, 1
      %v1283 = vsel %vm491, %v586, %v1282
      %v1284 = vshrl.u32 %v1273, 16
      %v1286 = vor.u32 %v1284, %v1282
      %v1288 = vshll.u32 %v1274, 16
      %v1290 = vrot.slane %v1288, 1
      %v1291 = vsel %vm491, %v1286, %v1290
      %v1292 = vshrl.u32 %v1274, 16
      %v1294 = vor.u32 %v1292, %v1290
      %v1296 = vshll.u32 %v1275, 16
      %v1298 = vrot.slane %v1296, 1
      %v1299 = vsel %vm491, %v1294, %v1298
      %v1300 = vshrl.u32 %v1275, 16
      %v1302 = vor.u32 %v1300, %v1298
      %v1304 = vshll.u32 %v1278, 16
      %v1306 = vrot.slane %v1304, 1
      %v1307 = vsel %vm491, %v1302, %v1306
      %1308 = vrot.lane.b32.xlu0 %v1283, 4
      %v1309 = vpop.permute.xlu0 %1308
      %1310 = vrot.lane.b32.xlu0 %v1291, 4
      %v1311 = vpop.permute.xlu0 %1310
      %1312 = vrot.lane.b32.xlu0 %v1299, 4
      %v1313 = vpop.permute.xlu0 %1312
      %1314 = vrot.lane.b32.xlu0 %v1307, 4
      %v1315 = vpop.permute.xlu0 %1314
      %v1316 = vrot.slane %v1273, 1
      %v1317 = vsel %vm616, %v638, %v1316
      %v1318 = vrot.slane %v1274, 1
      %v1319 = vsel %vm616, %v1316, %v1318
      %v1320 = vrot.slane %v1275, 1
      %v1321 = vsel %vm616, %v1318, %v1320
      %v1322 = vrot.slane %v1278, 1
      %v1323 = vsel %vm616, %v1320, %v1322
      %1324 = vrot.lane.b32.xlu0 %v1317, 8
      %v1325 = vpop.permute.xlu0 %1324
      %1326 = vrot.lane.b32.xlu0 %v1319, 8
      %v1327 = vpop.permute.xlu0 %1326
      %1328 = vrot.lane.b32.xlu0 %v1321, 8
      %v1329 = vpop.permute.xlu0 %1328
      %1330 = vrot.lane.b32.xlu0 %v1323, 8
      %v1331 = vpop.permute.xlu0 %1330
      %v1333 = vsel %vm666, %v487, %v1309
      %v1335 = vsel %vm666, %v1273, %v1311
      %v1337 = vsel %vm666, %v1274, %v1313
      %v1339 = vsel %vm666, %v1275, %v1315
      %v1341 = vsel %vm691, %v1333, %v1325
      %v1343 = vsel %vm691, %v1335, %v1327
      %v1345 = vsel %vm691, %v1337, %v1329
      %v1347 = vsel %vm691, %v1339, %v1331
      %s1348 = scalar_lea.vmem %s3, 16
      %v1349 = vld [vmem:[%s1348] sm:$0xf]
      %v1350 = vld [vmem:[%s1348 + $0x4] sm:$0x3]
      %v1353 = vunpack.c.l.b16 %v1349
      %v1354 = vunpack.c.l.b16 %v1350
      %v1355 = vpack.c.b16 %v1354, %v1353
      %v1356 = vsel %vm966, %v1341, 0
      %v1358 = vsel %vm966, %v1343, 0
      %v1360 = vsel %vm966, %v1345, 0
      %v1362 = vsel %vm966, %v1347, 0
      %v1365 = vsel %vm991, %v1355, 0
      %1367 = vmatprep.subr.bf16.mxu0 0
      %1368 = vmatpush1.bf16.msra.mxu0 0
      %1369 = vmatprep.subr.bf16.mxu0 0
      %1370 = vmatpush1.bf16.msra.mxu0 0
      %1371 = vmatprep.subr.bf16.mxu0 0
      %1372 = vmatpush1.bf16.msra.mxu0 0
      %1373 = vmatprep.subr.bf16.mxu0 0
      %1374 = vmatpush1.bf16.msra.mxu0 0
      %1375 = vmatprep.subr.bf16.mxu0 0
      %1376 = vmatpush1.bf16.msra.mxu0 0
      %1377 = vmatprep.subr.bf16.mxu0 0
      %1378 = vmatpush1.bf16.msra.mxu0 0
      %1379 = vmatprep.subr.bf16.mxu0 0
      %1380 = vmatpush1.bf16.msra.mxu0 0
      %1381 = vmatprep.subr.bf16.mxu0 0
      %1382 = vmatpush1.bf16.msra.mxu0 %v1365
      %1383 = vmatprep.subr.bf16.mxu0 0
      %1384 = vmatpush2.bf16.msra.mxu0 0
      %1385 = vmatprep.subr.bf16.mxu0 0
      %1386 = vmatpush2.bf16.msra.mxu0 0
      %1387 = vmatprep.subr.bf16.mxu0 0
      %1388 = vmatpush2.bf16.msra.mxu0 0
      %1389 = vmatprep.subr.bf16.mxu0 0
      %1390 = vmatpush2.bf16.msra.mxu0 0
      %1391 = vmatprep.subr.bf16.mxu0 0
      %1392 = vmatpush2.bf16.msra.mxu0 0
      %1393 = vmatprep.subr.bf16.mxu0 0
      %1394 = vmatpush2.bf16.msra.mxu0 0
      %1395 = vmatprep.subr.bf16.mxu0 0
      %1396 = vmatpush2.bf16.msra.mxu0 0
      %1397 = vmatprep.subr.bf16.mxu0 0
      %1398 = vmatpush2.bf16.msra.mxu0 0
      %1399 = vmatprep.mubr.bf16.mxu0 0
      %1400 = vmatmul.mubr.bf16.gmra.mxu0 %v1127
      %v1401 = vpop.f32.mrf.mxu0
      %v1402 = vadd.f32 0.0, %v1401
      %v1403 = vpop.f32.mrf.mxu0
      %v1404 = vpop.f32.mrf.mxu0
      %v1405 = vadd.f32 0.0, %v1404
      %v1406 = vpop.f32.mrf.mxu0
      %1407 = vmatprep.mubr.bf16.mxu0 0
      %1408 = vmatmul.mubr.bf16.gmra.mxu0 %v1129
      %v1409 = vpop.f32.mrf.mxu0
      %v1410 = vpop.f32.mrf.mxu0
      %v1411 = vpop.f32.mrf.mxu0
      %v1412 = vadd.f32 0.0, %v1411
      %v1413 = vpop.f32.mrf.mxu0
      %1414 = vmatprep.mubr.bf16.mxu0 0
      %1415 = vmatmul.mubr.bf16.gmra.mxu0 %v1131
      %v1416 = vpop.f32.mrf.mxu0
      %v1417 = vadd.f32 0.0, %v1416
      %v1418 = vpop.f32.mrf.mxu0
      %v1419 = vpop.f32.mrf.mxu0
      %v1420 = vpop.f32.mrf.mxu0
      %1421 = vmatprep.mubr.bf16.mxu0 0
      %1422 = vmatmul.mubr.bf16.gmra.mxu0 %v1133
      %v1423 = vpop.f32.mrf.mxu0
      %v1424 = vadd.f32 0.0, %v1423
      %v1425 = vpop.f32.mrf.mxu0
      %v1426 = vpop.f32.mrf.mxu0
      %v1427 = vadd.f32 0.0, %v1426
      %v1428 = vpop.f32.mrf.mxu0
      %1429 = vmatprep.mubr.bf16.mxu0 0
      %1430 = vmatmul.mubr.bf16.gmra.mxu0 %v1135
      %v1431 = vpop.f32.mrf.mxu0
      %v1432 = vpop.f32.mrf.mxu0
      %v1433 = vpop.f32.mrf.mxu0
      %v1434 = vadd.f32 0.0, %v1433
      %v1435 = vpop.f32.mrf.mxu0
      %1436 = vmatprep.mubr.bf16.mxu0 0
      %1437 = vmatmul.mubr.bf16.gmra.mxu0 %v1137
      %v1438 = vpop.f32.mrf.mxu0
      %v1439 = vadd.f32 0.0, %v1438
      %v1440 = vpop.f32.mrf.mxu0
      %v1441 = vpop.f32.mrf.mxu0
      %v1442 = vpop.f32.mrf.mxu0
      %1443 = vmatprep.mubr.bf16.mxu0 0
      %1444 = vmatmul.mubr.bf16.gmra.mxu0 %v1139
      %v1445 = vpop.f32.mrf.mxu0
      %v1446 = vadd.f32 0.0, %v1445
      %v1447 = vpop.f32.mrf.mxu0
      %v1448 = vpop.f32.mrf.mxu0
      %v1449 = vadd.f32 0.0, %v1448
      %v1450 = vpop.f32.mrf.mxu0
      %1451 = vmatprep.mubr.bf16.mxu0 0
      %1452 = vmatmul.mubr.bf16.gmra.mxu0 %v1141
      %v1453 = vpop.f32.mrf.mxu0
      %v1454 = vpop.f32.mrf.mxu0
      %v1455 = vpop.f32.mrf.mxu0
      %v1456 = vadd.f32 0.0, %v1455
      %v1457 = vpop.f32.mrf.mxu0
      %1458 = vmatprep.mubr.bf16.mxu0 0
      %1459 = vmatmul.mubr.bf16.gmra.mxu0 %v1356
      %v1460 = vpop.f32.mrf.mxu0
      %v1461 = vadd.f32 0.0, %v1460
      %v1462 = vpop.f32.mrf.mxu0
      %v1463 = vpop.f32.mrf.mxu0
      %v1464 = vpop.f32.mrf.mxu0
      %1465 = vmatprep.mubr.bf16.mxu0 0
      %1466 = vmatmul.mubr.bf16.gmra.mxu0 %v1358
      %v1467 = vpop.f32.mrf.mxu0
      %v1468 = vadd.f32 0.0, %v1467
      %v1469 = vpop.f32.mrf.mxu0
      %v1470 = vpop.f32.mrf.mxu0
      %v1471 = vadd.f32 0.0, %v1470
      %v1472 = vpop.f32.mrf.mxu0
      %1473 = vmatprep.mubr.bf16.mxu0 0
      %1474 = vmatmul.mubr.bf16.gmra.mxu0 %v1360
      %v1475 = vpop.f32.mrf.mxu0
      %v1476 = vpop.f32.mrf.mxu0
      %v1477 = vpop.f32.mrf.mxu0
      %v1478 = vadd.f32 0.0, %v1477
      %v1479 = vpop.f32.mrf.mxu0
      %1480 = vmatprep.mubr.bf16.mxu0 0
      %1481 = vmatmul.mubr.bf16.gmra.mxu0 %v1362
      %v1482 = vpop.f32.mrf.mxu0
      %v1483 = vadd.f32 0.0, %v1482
      %v1484 = vpop.f32.mrf.mxu0
      %v1485 = vpop.f32.mrf.mxu0
      %v1486 = vpop.f32.mrf.mxu0
      %1487 = vdwg.mxu0
      %v1488 = vadd.f32 %v1183, %v1402
      %v1489 = vadd.f32 %v1186, %v1405
      %v1490 = vadd.f32 %v1193, %v1412
      %v1491 = vadd.f32 %v1198, %v1417
      %v1492 = vadd.f32 %v1205, %v1424
      %v1493 = vadd.f32 %v1208, %v1427
      %v1494 = vadd.f32 %v1215, %v1434
      %v1495 = vadd.f32 %v1220, %v1439
      %v1496 = vadd.f32 %v1227, %v1446
      %v1497 = vadd.f32 %v1230, %v1449
      %v1498 = vadd.f32 %v1237, %v1456
      %v1499 = vadd.f32 %v1242, %v1461
      %v1500 = vadd.f32 %v1249, %v1468
      %v1501 = vadd.f32 %v1252, %v1471
      %v1502 = vadd.f32 %v1259, %v1478
      %v1503 = vadd.f32 %v1264, %v1483
      %v1504 = vld [vmem:[%s4] sm:$0x1]
      %v1506 = vlaneseq
      %v1507 = vshrl.u32 %v1506, 7
      %v1508 = vsub.s32 0, %v1507
      %v1509 = vrot.slane %v1504, %v1508
      %v1511 = vadd.f32 %v1488, %v1509
      %v1512 = vadd.f32 %v1489, %v1509
      %v1513 = vadd.f32 %v1490, %v1509
      %v1514 = vadd.f32 %v1491, %v1509
      %v1515 = vadd.f32 %v1492, %v1509
      %v1516 = vadd.f32 %v1493, %v1509
      %v1517 = vadd.f32 %v1494, %v1509
      %v1518 = vadd.f32 %v1495, %v1509
      %v1519 = vadd.f32 %v1496, %v1509
      %v1520 = vadd.f32 %v1497, %v1509
      %v1521 = vadd.f32 %v1498, %v1509
      %v1522 = vadd.f32 %v1499, %v1509
      %v1523 = vadd.f32 %v1500, %v1509
      %v1524 = vadd.f32 %v1501, %v1509
      %v1525 = vadd.f32 %v1502, %v1509
      %v1526 = vadd.f32 %v1503, %v1509
      %v1527 = vxor.u32 %v1511, 2147483648
      %v1528 = vxor.u32 %v1512, 2147483648
      %v1529 = vxor.u32 %v1513, 2147483648
      %v1530 = vxor.u32 %v1514, 2147483648
      %v1531 = vxor.u32 %v1515, 2147483648
      %v1532 = vxor.u32 %v1516, 2147483648
      %v1533 = vxor.u32 %v1517, 2147483648
      %v1534 = vxor.u32 %v1518, 2147483648
      %v1535 = vxor.u32 %v1519, 2147483648
      %v1536 = vxor.u32 %v1520, 2147483648
      %v1537 = vxor.u32 %v1521, 2147483648
      %v1538 = vxor.u32 %v1522, 2147483648
      %v1539 = vxor.u32 %v1523, 2147483648
      %v1540 = vxor.u32 %v1524, 2147483648
      %v1541 = vxor.u32 %v1525, 2147483648
      %v1542 = vxor.u32 %v1526, 2147483648
      %v1543 = vmul.f32 %v1527, 1.442695
      %v1544 = vpow.pop %v1543
      %v1545 = vmul.f32 %v1528, 1.442695
      %v1546 = vpow.pop %v1545
      %v1547 = vmul.f32 %v1529, 1.442695
      %v1548 = vpow.pop %v1547
      %v1549 = vmul.f32 %v1530, 1.442695
      %v1550 = vpow.pop %v1549
      %v1551 = vmul.f32 %v1531, 1.442695
      %v1552 = vpow.pop %v1551
      %v1553 = vmul.f32 %v1532, 1.442695
      %v1554 = vpow.pop %v1553
      %v1555 = vmul.f32 %v1533, 1.442695
      %v1556 = vpow.pop %v1555
      %v1557 = vmul.f32 %v1534, 1.442695
      %v1558 = vpow.pop %v1557
      %v1559 = vmul.f32 %v1535, 1.442695
      %v1560 = vpow.pop %v1559
      %v1561 = vmul.f32 %v1536, 1.442695
      %v1562 = vpow.pop %v1561
      %v1563 = vmul.f32 %v1537, 1.442695
      %v1564 = vpow.pop %v1563
      %v1565 = vmul.f32 %v1538, 1.442695
      %v1566 = vpow.pop %v1565
      %v1567 = vmul.f32 %v1539, 1.442695
      %v1568 = vpow.pop %v1567
      %v1569 = vmul.f32 %v1540, 1.442695
      %v1570 = vpow.pop %v1569
      %v1571 = vmul.f32 %v1541, 1.442695
      %v1572 = vpow.pop %v1571
      %v1573 = vmul.f32 %v1542, 1.442695
      %v1574 = vpow.pop %v1573
      %v1575 = vadd.f32 %v1544, 1.0
      %v1576 = vadd.f32 %v1546, 1.0
      %v1577 = vadd.f32 %v1548, 1.0
      %v1578 = vadd.f32 %v1550, 1.0
      %v1579 = vadd.f32 %v1552, 1.0
      %v1580 = vadd.f32 %v1554, 1.0
      %v1581 = vadd.f32 %v1556, 1.0
      %v1582 = vadd.f32 %v1558, 1.0
      %v1583 = vadd.f32 %v1560, 1.0
      %v1584 = vadd.f32 %v1562, 1.0
      %v1585 = vadd.f32 %v1564, 1.0
      %v1586 = vadd.f32 %v1566, 1.0
      %v1587 = vadd.f32 %v1568, 1.0
      %v1588 = vadd.f32 %v1570, 1.0
      %v1589 = vadd.f32 %v1572, 1.0
      %v1590 = vadd.f32 %v1574, 1.0
      %v1591 = vrcp.pop %v1575
      %v1592 = vmul.f32 1.0, %v1591
      %v1593 = vrcp.pop %v1576
      %v1594 = vmul.f32 1.0, %v1593
      %v1595 = vrcp.pop %v1577
      %v1596 = vmul.f32 1.0, %v1595
      %v1597 = vrcp.pop %v1578
      %v1598 = vmul.f32 1.0, %v1597
      %v1599 = vrcp.pop %v1579
      %v1600 = vmul.f32 1.0, %v1599
      %v1601 = vrcp.pop %v1580
      %v1602 = vmul.f32 1.0, %v1601
      %v1603 = vrcp.pop %v1581
      %v1604 = vmul.f32 1.0, %v1603
      %v1605 = vrcp.pop %v1582
      %v1606 = vmul.f32 1.0, %v1605
      %v1607 = vrcp.pop %v1583
      %v1608 = vmul.f32 1.0, %v1607
      %v1609 = vrcp.pop %v1584
      %v1610 = vmul.f32 1.0, %v1609
      %v1611 = vrcp.pop %v1585
      %v1612 = vmul.f32 1.0, %v1611
      %v1613 = vrcp.pop %v1586
      %v1614 = vmul.f32 1.0, %v1613
      %v1615 = vrcp.pop %v1587
      %v1616 = vmul.f32 1.0, %v1615
      %v1617 = vrcp.pop %v1588
      %v1618 = vmul.f32 1.0, %v1617
      %v1619 = vrcp.pop %v1589
      %v1620 = vmul.f32 1.0, %v1619
      %v1621 = vrcp.pop %v1590
      %v1622 = vmul.f32 1.0, %v1621
      %v1623 = vmul.f32 %v1511, %v1592
      %v1624 = vmul.f32 %v1512, %v1594
      %v1625 = vmul.f32 %v1513, %v1596
      %v1626 = vmul.f32 %v1514, %v1598
      %v1627 = vmul.f32 %v1515, %v1600
      %v1628 = vmul.f32 %v1516, %v1602
      %v1629 = vmul.f32 %v1517, %v1604
      %v1630 = vmul.f32 %v1518, %v1606
      %v1631 = vmul.f32 %v1519, %v1608
      %v1632 = vmul.f32 %v1520, %v1610
      %v1633 = vmul.f32 %v1521, %v1612
      %v1634 = vmul.f32 %v1522, %v1614
      %v1635 = vmul.f32 %v1523, %v1616
      %v1636 = vmul.f32 %v1524, %v1618
      %v1637 = vmul.f32 %v1525, %v1620
      %v1638 = vmul.f32 %v1526, %v1622
      %1639 = vst.msk [vmem:[%s395] sm:$0xff] %vm691, %v1623
      %1640 = vst.msk [vmem:[%s395 + $0x8] sm:$0xff] %vm691, %v1624
      %1641 = vst.msk [vmem:[%s395 + $0x10] sm:$0xff] %vm691, %v1625
      %1642 = vst.msk [vmem:[%s395 + $0x18] sm:$0xff] %vm691, %v1626
      %1643 = vst.msk [vmem:[%s395 + $0x20] sm:$0xff] %vm691, %v1627
      %1644 = vst.msk [vmem:[%s395 + $0x28] sm:$0xff] %vm691, %v1628
      %1645 = vst.msk [vmem:[%s395 + $0x30] sm:$0xff] %vm691, %v1629
      %1646 = vst.msk [vmem:[%s395 + $0x38] sm:$0xff] %vm691, %v1630
      %1647 = vst.msk [vmem:[%s395 + $0x40] sm:$0xff] %vm691, %v1631
      %1648 = vst.msk [vmem:[%s395 + $0x48] sm:$0xff] %vm691, %v1632
      %1649 = vst.msk [vmem:[%s395 + $0x50] sm:$0xff] %vm691, %v1633
      %1650 = vst.msk [vmem:[%s395 + $0x58] sm:$0xff] %vm691, %v1634
      %1651 = vst.msk [vmem:[%s395 + $0x60] sm:$0xff] %vm691, %v1635
      %1652 = vst.msk [vmem:[%s395 + $0x68] sm:$0xff] %vm691, %v1636
      %1653 = vst.msk [vmem:[%s395 + $0x70] sm:$0xff] %vm691, %v1637
      %1654 = vst.msk [vmem:[%s395 + $0x78] sm:$0xff] %vm691, %v1638
      %s1655 = smul.u32 8, %s21
      %p1656 = scmp.lt.s32.totalorder %s20, 1
      %s1657 = scalar_select %p1656, %s20, 1
      %p1658 = scmp.lt.s32.totalorder %s1655, 15
      %s1659 = scalar_select %p1658, %s1655, 15
      %s1660 = smul.addr %s1659, 2
      %s1661 = smul.addr %s1657, 32
      %s1662 = sadd.s32 %s1660, %s1661
      %s1663 = smul.addr %s1662, 8
      %s1664 = scalar_lea.vmem %s5, %s1663
      // Predicated region
      $region41: #{repconv_forward.1} parent=39 // pred_check
        %p1665 = pneg %p184
      $region42: #{repconv_forward.1} parent=39 // pred_check_branch
        %1667 = sbr.rel (%p1665) target = $region44
      $region43: #{repconv_forward.1} parent=39 // pred_region
        %s1668 = smul.u32 8, %s21
      $region44: #{repconv_forward.1} parent=39 // pred_fallthru
        _
    $region40: #{repconv_forward.1} parent=5 // pred_fallthru
      _
    %p1669 = scmp.le.s32.totalorder 2, %s11
    // Predicated region
    $region45: #{repconv_forward.1} parent=5 // pred_check
      %p1670 = pneg %p1669
    $region46: #{repconv_forward.1} parent=5 // pred_check_branch
      %1672 = sbr.rel (%p1670) target = $region48
    $region47: #{repconv_forward.1} parent=5 // pred_region
      %s1673 = ssub.s32 %s11, 2
      // Predicated region
      $region49: #{repconv_forward.1} parent=47 // pred_check
        %p1674 = pneg %p190
      $region50: #{repconv_forward.1} parent=47 // pred_check_branch
        %1676 = sbr.rel (%p1674) target = $region52
      $region51: #{repconv_forward.1} parent=47 // pred_region
        %s1677 = smul.u32 8, %s23
        %p1678 = scmp.lt.s32.totalorder %s22, 1
        %s1679 = scalar_select %p1678, %s22, 1
        %p1680 = scmp.lt.s32.totalorder %s1677, 15
        %s1681 = scalar_select %p1680, %s1677, 15
        %s1682 = smul.addr %s1681, 2
        %s1683 = smul.addr %s1679, 32
        %s1684 = sadd.s32 %s1682, %s1683
        %s1685 = smul.addr %s1684, 8
        %s1686 = scalar_lea.vmem %s5, %s1685
      $region52: #{repconv_forward.1} parent=47 // pred_fallthru
        _
    $region48: #{repconv_forward.1} parent=5 // pred_fallthru
      _
  $region6: #{repconv_forward.1} parent=0 // loop_footer
    %s15 = sadd.s32 1, %s11
  $region7: #{repconv_forward.1} parent=0 // loop_footer_branch
    %10 = sbr.rel target = $region3
  $region8: #{repconv_forward.1} parent=0 // loop_exit
    _

</llo_original>
